<compile_context>
chip_gen: v5e
topology: v5e:2x2
jax: 0.10.0
libtpu: 0.0.40
codegen_flags: <defaults>
</compile_context>

<pallas_src>
import functools

import jax
import jax.numpy as jnp
import numpy as np
from jax.experimental import pallas as pl
from jax.experimental.pallas import tpu as pltpu


def cnnblock_kernel(x_ref, w_ref, scale_ref, bias_ref, o_ref, patch_ref,
                    *, th, Wo, KH, KW, Cin):
    # x_ref:     (Hp, Wp, Cin)        padded input image (bf16), resident per n
    # w_ref:     (KH*KW*Cin, tc)      flattened conv weights (bf16)
    # scale_ref: (1, tc)              folded BN scale (f32)
    # bias_ref:  (1, tc)              folded BN bias  (f32)
    # o_ref:     (th*Wo, tc)          lane-dense output tile (f32)
    # patch_ref: (th*Wo, KH*KW*Cin)   im2col scratch (bf16)
    h0 = pl.program_id(1) * th                       # first output row of this tile

    # --- im2col: gather the KH*KW shifted windows once into VMEM scratch ---
    for kh in range(KH):
        rows = x_ref[pl.ds(h0 + kh, th)]             # (th, Wp, Cin)
        for kw in range(KW):
            piece = rows[:, kw:kw + Wo, :].reshape(th * Wo, Cin)
            col0 = (kh * KW + kw) * Cin
            patch_ref[:, col0:col0 + Cin] = piece

    # --- single MXU push: (th*Wo, KH*KW*Cin) @ (KH*KW*Cin, tc), f32 accumulate ---
    acc = jnp.dot(patch_ref[...], w_ref[...], preferred_element_type=jnp.float32)

    # --- folded BatchNorm + LeakyReLU(0.1) on the VPU, lane-dense store ---
    y = acc * scale_ref[...] + bias_ref[...]
    o_ref[...] = jnp.where(y > 0, y, 0.1 * y).astype(o_ref.dtype)


def _pick_tile_h(Ho, Wo, target_rows=128):
    """Largest th dividing Ho with th*Wo <= target_rows and sublane-aligned."""
    best = Ho                                        # full extent is always legal
    for th in range(1, Ho + 1):
        if Ho % th == 0 and th * Wo <= target_rows and (th * Wo) % 8 == 0:
            best = th
    return best


def cnn_block(x_nchw, w_oihw, gamma, beta, running_mean, running_var,
              *, padding=1, eps=1e-5):
    """CNNBlock forward. Input NCHW (PyTorch convention), output NCHW. Stride 1."""
    N, Cin, H, W = x_nchw.shape
    Cout, _, KH, KW = w_oihw.shape

    # Layout glue (a production model should stay NHWC end-to-end instead).
    x = jnp.transpose(x_nchw, (0, 2, 3, 1))                              # (N,H,W,Cin)
    w = jnp.transpose(w_oihw, (2, 3, 1, 0)).reshape(KH * KW * Cin, Cout)  # (K, Cout)

    # Fold eval-mode BatchNorm into per-channel scale/bias (f32).
    scale = gamma / jnp.sqrt(running_var + eps)
    bias = beta - running_mean * scale

    # Pad Cout to a multiple of 128: lane-dense stores + full MXU N dimension.
    LANE = 128
    Cp = ((Cout + LANE - 1) // LANE) * LANE
    if Cp != Cout:
        w = jnp.pad(w, ((0, 0), (0, Cp - Cout)))
        scale = jnp.pad(scale, (0, Cp - Cout))
        bias = jnp.pad(bias, (0, Cp - Cout))

    # Spatial zero-padding (wrapper side).
    # TODO(synk): move padding into the kernel via halo DMA to save one HBM pass.
    xp = jnp.pad(x, ((0, 0), (padding, padding), (padding, padding), (0, 0)))
    Hp, Wp = H + 2 * padding, W + 2 * padding
    Ho, Wo = Hp - KH + 1, Wp - KW + 1                                     # stride 1

    # bf16 big tensors, f32 affine params.
    xp = xp.astype(jnp.bfloat16)
    w = w.astype(jnp.bfloat16)
    scale = scale.astype(jnp.float32).reshape(1, Cp)
    bias = bias.astype(jnp.float32).reshape(1, Cp)

    th = _pick_tile_h(Ho, Wo)                 # H tile  (th*Wo ~ 128 matmul rows)
    tc = 256 if Cp % 256 == 0 else 128        # Cout tile (bounds resident weights)
    K = KH * KW * Cin
    grid = (N, Ho // th, Cp // tc)

    kernel = functools.partial(cnnblock_kernel,
                               th=th, Wo=Wo, KH=KH, KW=KW, Cin=Cin)

    out = pl.pallas_call(
        kernel,
        out_shape=jax.ShapeDtypeStruct((N, Ho * Wo, Cp), jnp.float32),
        grid=grid,
        in_specs=[
            # Full padded image: block index depends only on n, so it stays
            # resident in VMEM across the h/c grid steps of one batch element.
            pl.BlockSpec((None, Hp, Wp, Cin), lambda n, h, c: (n, 0, 0, 0)),
            pl.BlockSpec((K, tc), lambda n, h, c: (0, c)),
            pl.BlockSpec((1, tc), lambda n, h, c: (0, c)),
            pl.BlockSpec((1, tc), lambda n, h, c: (0, c)),
        ],
        out_specs=pl.BlockSpec((None, th * Wo, tc), lambda n, h, c: (n, h, c)),
        scratch_shapes=[pltpu.VMEM((th * Wo, K), jnp.bfloat16)],
        compiler_params=pltpu.CompilerParams(
            dimension_semantics=("parallel", "parallel", "parallel")),
    )(xp, w, scale, bias)

    # Drop channel padding, back to NCHW (layout glue).
    out = out.reshape(N, Ho, Wo, Cp)[..., :Cout]
    return jnp.transpose(out, (0, 3, 1, 2))


def reference(x_nchw, w_oihw, gamma, beta, running_mean, running_var,
              *, padding=1, eps=1e-5):
    # Matches the kernel's mixed precision: bf16-rounded inputs, f32 math.
    x = jnp.transpose(x_nchw, (0, 2, 3, 1)).astype(jnp.bfloat16).astype(jnp.float32)
    w = jnp.transpose(w_oihw, (2, 3, 1, 0)).astype(jnp.bfloat16).astype(jnp.float32)
    y = jax.lax.conv_general_dilated(
        x, w, window_strides=(1, 1),
        padding=[(padding, padding), (padding, padding)],
        dimension_numbers=("NHWC", "HWIO", "NHWC"),
        precision=jax.lax.Precision.HIGHEST)
    scale = gamma / jnp.sqrt(running_var + eps)
    bias = beta - running_mean * scale
    y = y * scale + bias
    y = jnp.where(y > 0, y, 0.1 * y)
    return jnp.transpose(y, (0, 3, 1, 2))


if __name__ == "__main__":
    key = jax.random.PRNGKey(0)
    kx, kw, kg, kb, km, kv = jax.random.split(key, 6)

    N, Cin, H, W = 2, 4, 16, 16
    Cout, KH, KW = 8, 3, 3

    x = jax.random.normal(kx, (N, Cin, H, W), dtype=jnp.float32)
    w = jax.random.normal(kw, (Cout, Cin, KH, KW), dtype=jnp.float32) * 0.1
    gamma = 1.0 + 0.1 * jax.random.normal(kg, (Cout,), dtype=jnp.float32)
    beta = 0.1 * jax.random.normal(kb, (Cout,), dtype=jnp.float32)
    running_mean = 0.1 * jax.random.normal(km, (Cout,), dtype=jnp.float32)
    running_var = jnp.abs(jax.random.normal(kv, (Cout,), dtype=jnp.float32)) + 0.5

    y = jax.block_until_ready(
        cnn_block(x, w, gamma, beta, running_mean, running_var))
    y_ref = jax.block_until_ready(
        reference(x, w, gamma, beta, running_mean, running_var))

    np.testing.assert_allclose(np.asarray(y), np.asarray(y_ref),
                               rtol=1e-3, atol=1e-3)
    print("KERNEL_OK")
</pallas_src>

<mosaic_0001>
module attributes {stable_mosaic.version = 11 : i64} {
  func.func @cnnblock_kernel(%arg0: i32, %arg1: i32, %arg2: i32, %arg3: memref<1x18x18x4xbf16, #tpu.memory_space<vmem>>, %arg4: memref<36x128xbf16, #tpu.memory_space<vmem>>, %arg5: memref<1x128xf32, #tpu.memory_space<vmem>>, %arg6: memref<1x128xf32, #tpu.memory_space<vmem>>, %arg7: memref<1x128x128xf32, #tpu.memory_space<vmem>>, %arg8: memref<128x36xbf16, #tpu.memory_space<vmem>>) attributes {dimension_semantics = [#tpu.dimension_semantics<parallel>, #tpu.dimension_semantics<parallel>, #tpu.dimension_semantics<parallel>], iteration_bounds = array<i64: 2, 2, 1>, scalar_prefetch = 0 : i64, scratch_operands = 1 : i64, tpu.core_type = #tpu.core_type<tc>, window_params = [{transform_indices = @transform_0, window_bounds = array<i64: 1, 18, 18, 4>}, {transform_indices = @transform_1, window_bounds = array<i64: 36, 128>}, {transform_indices = @transform_2, window_bounds = array<i64: 1, 128>}, {transform_indices = @transform_3, window_bounds = array<i64: 1, 128>}, {transform_indices = @transform_4, window_bounds = array<i64: 1, 128, 128>}]} {
    %c8_i32 = arith.constant 8 : i32
    %0 = arith.muli %arg1, %c8_i32 : i32
    %c0_i32 = arith.constant 0 : i32
    %1 = arith.addi %0, %c0_i32 : i32
    %c0 = arith.constant 0 : index
    %2 = arith.index_cast %1 : i32 to index
    %c0_0 = arith.constant 0 : index
    %c0_1 = arith.constant 0 : index
    %3 = vector.load %arg3[%c0, %2, %c0_0, %c0_1] : memref<1x18x18x4xbf16, #tpu.memory_space<vmem>>, vector<1x8x18x4xbf16>
    %4 = vector.shape_cast %3 : vector<1x8x18x4xbf16> to vector<8x18x4xbf16>
    %5 = vector.extract_strided_slice %4 {offsets = [0, 0, 0], sizes = [8, 16, 4], strides = [1, 1, 1]} : vector<8x18x4xbf16> to vector<8x16x4xbf16>
    %6 = vector.shape_cast %5 : vector<8x16x4xbf16> to vector<128x4xbf16>
    %c0_2 = arith.constant 0 : index
    %c0_3 = arith.constant 0 : index
    %7 = vector.load %arg8[%c0_2, %c0_3] : memref<128x36xbf16, #tpu.memory_space<vmem>>, vector<128x4xbf16>
    tpu.vector_store %arg8[%c0_2, %c0_3], %6 {strides = array<i32>} : memref<128x36xbf16, #tpu.memory_space<vmem>>, vector<128x4xbf16>,
    %8 = vector.extract_strided_slice %4 {offsets = [0, 1, 0], sizes = [8, 16, 4], strides = [1, 1, 1]} : vector<8x18x4xbf16> to vector<8x16x4xbf16>
    %9 = vector.shape_cast %8 : vector<8x16x4xbf16> to vector<128x4xbf16>
    %c0_4 = arith.constant 0 : index
    %c4 = arith.constant 4 : index
    %10 = vector.load %arg8[%c0_4, %c4] : memref<128x36xbf16, #tpu.memory_space<vmem>>, vector<128x4xbf16>
    tpu.vector_store %arg8[%c0_4, %c4], %9 {strides = array<i32>} : memref<128x36xbf16, #tpu.memory_space<vmem>>, vector<128x4xbf16>,
    %11 = vector.extract_strided_slice %4 {offsets = [0, 2, 0], sizes = [8, 16, 4], strides = [1, 1, 1]} : vector<8x18x4xbf16> to vector<8x16x4xbf16>
    %12 = vector.shape_cast %11 : vector<8x16x4xbf16> to vector<128x4xbf16>
    %c0_5 = arith.constant 0 : index
    %c8 = arith.constant 8 : index
    %13 = vector.load %arg8[%c0_5, %c8] : memref<128x36xbf16, #tpu.memory_space<vmem>>, vector<128x4xbf16>
    tpu.vector_store %arg8[%c0_5, %c8], %12 {strides = array<i32>} : memref<128x36xbf16, #tpu.memory_space<vmem>>, vector<128x4xbf16>,
    %c1_i32 = arith.constant 1 : i32
    %14 = arith.addi %0, %c1_i32 : i32
    %c0_6 = arith.constant 0 : index
    %15 = arith.index_cast %14 : i32 to index
    %c0_7 = arith.constant 0 : index
    %c0_8 = arith.constant 0 : index
    %16 = vector.load %arg3[%c0_6, %15, %c0_7, %c0_8] : memref<1x18x18x4xbf16, #tpu.memory_space<vmem>>, vector<1x8x18x4xbf16>
    %17 = vector.shape_cast %16 : vector<1x8x18x4xbf16> to vector<8x18x4xbf16>
    %18 = vector.extract_strided_slice %17 {offsets = [0, 0, 0], sizes = [8, 16, 4], strides = [1, 1, 1]} : vector<8x18x4xbf16> to vector<8x16x4xbf16>
    %19 = vector.shape_cast %18 : vector<8x16x4xbf16> to vector<128x4xbf16>
    %c0_9 = arith.constant 0 : index
    %c12 = arith.constant 12 : index
    %20 = vector.load %arg8[%c0_9, %c12] : memref<128x36xbf16, #tpu.memory_space<vmem>>, vector<128x4xbf16>
    tpu.vector_store %arg8[%c0_9, %c12], %19 {strides = array<i32>} : memref<128x36xbf16, #tpu.memory_space<vmem>>, vector<128x4xbf16>,
    %21 = vector.extract_strided_slice %17 {offsets = [0, 1, 0], sizes = [8, 16, 4], strides = [1, 1, 1]} : vector<8x18x4xbf16> to vector<8x16x4xbf16>
    %22 = vector.shape_cast %21 : vector<8x16x4xbf16> to vector<128x4xbf16>
    %c0_10 = arith.constant 0 : index
    %c16 = arith.constant 16 : index
    %23 = vector.load %arg8[%c0_10, %c16] : memref<128x36xbf16, #tpu.memory_space<vmem>>, vector<128x4xbf16>
    tpu.vector_store %arg8[%c0_10, %c16], %22 {strides = array<i32>} : memref<128x36xbf16, #tpu.memory_space<vmem>>, vector<128x4xbf16>,
    %24 = vector.extract_strided_slice %17 {offsets = [0, 2, 0], sizes = [8, 16, 4], strides = [1, 1, 1]} : vector<8x18x4xbf16> to vector<8x16x4xbf16>
    %25 = vector.shape_cast %24 : vector<8x16x4xbf16> to vector<128x4xbf16>
    %c0_11 = arith.constant 0 : index
    %c20 = arith.constant 20 : index
    %26 = vector.load %arg8[%c0_11, %c20] : memref<128x36xbf16, #tpu.memory_space<vmem>>, vector<128x4xbf16>
    tpu.vector_store %arg8[%c0_11, %c20], %25 {strides = array<i32>} : memref<128x36xbf16, #tpu.memory_space<vmem>>, vector<128x4xbf16>,
    %c2_i32 = arith.constant 2 : i32
    %27 = arith.addi %0, %c2_i32 : i32
    %c0_12 = arith.constant 0 : index
    %28 = arith.index_cast %27 : i32 to index
    %c0_13 = arith.constant 0 : index
    %c0_14 = arith.constant 0 : index
    %29 = vector.load %arg3[%c0_12, %28, %c0_13, %c0_14] : memref<1x18x18x4xbf16, #tpu.memory_space<vmem>>, vector<1x8x18x4xbf16>
    %30 = vector.shape_cast %29 : vector<1x8x18x4xbf16> to vector<8x18x4xbf16>
    %31 = vector.extract_strided_slice %30 {offsets = [0, 0, 0], sizes = [8, 16, 4], strides = [1, 1, 1]} : vector<8x18x4xbf16> to vector<8x16x4xbf16>
    %32 = vector.shape_cast %31 : vector<8x16x4xbf16> to vector<128x4xbf16>
    %c0_15 = arith.constant 0 : index
    %c24 = arith.constant 24 : index
    %33 = vector.load %arg8[%c0_15, %c24] : memref<128x36xbf16, #tpu.memory_space<vmem>>, vector<128x4xbf16>
    tpu.vector_store %arg8[%c0_15, %c24], %32 {strides = array<i32>} : memref<128x36xbf16, #tpu.memory_space<vmem>>, vector<128x4xbf16>,
    %34 = vector.extract_strided_slice %30 {offsets = [0, 1, 0], sizes = [8, 16, 4], strides = [1, 1, 1]} : vector<8x18x4xbf16> to vector<8x16x4xbf16>
    %35 = vector.shape_cast %34 : vector<8x16x4xbf16> to vector<128x4xbf16>
    %c0_16 = arith.constant 0 : index
    %c28 = arith.constant 28 : index
    %36 = vector.load %arg8[%c0_16, %c28] : memref<128x36xbf16, #tpu.memory_space<vmem>>, vector<128x4xbf16>
    tpu.vector_store %arg8[%c0_16, %c28], %35 {strides = array<i32>} : memref<128x36xbf16, #tpu.memory_space<vmem>>, vector<128x4xbf16>,
    %37 = vector.extract_strided_slice %30 {offsets = [0, 2, 0], sizes = [8, 16, 4], strides = [1, 1, 1]} : vector<8x18x4xbf16> to vector<8x16x4xbf16>
    %38 = vector.shape_cast %37 : vector<8x16x4xbf16> to vector<128x4xbf16>
    %c0_17 = arith.constant 0 : index
    %c32 = arith.constant 32 : index
    %39 = vector.load %arg8[%c0_17, %c32] : memref<128x36xbf16, #tpu.memory_space<vmem>>, vector<128x4xbf16>
    tpu.vector_store %arg8[%c0_17, %c32], %38 {strides = array<i32>} : memref<128x36xbf16, #tpu.memory_space<vmem>>, vector<128x4xbf16>,
    %c0_18 = arith.constant 0 : index
    %c0_19 = arith.constant 0 : index
    %40 = vector.load %arg8[%c0_18, %c0_19] : memref<128x36xbf16, #tpu.memory_space<vmem>>, vector<128x36xbf16>
    %c0_20 = arith.constant 0 : index
    %c0_21 = arith.constant 0 : index
    %41 = vector.load %arg4[%c0_20, %c0_21] : memref<36x128xbf16, #tpu.memory_space<vmem>>, vector<36x128xbf16>
    %cst = arith.constant dense<0.000000e+00> : vector<128x128xf32>
    %42 = tpu.matmul %40, %41, %cst {dimension_numbers = #tpu.dot_dimension_numbers<[1], [0], [0], [1], [0, 0, 1, 1], [], []>} : vector<128x36xbf16>, vector<36x128xbf16>, vector<128x128xf32> -> vector<128x128xf32>
    %c0_22 = arith.constant 0 : index
    %c0_23 = arith.constant 0 : index
    %43 = vector.load %arg5[%c0_22, %c0_23] : memref<1x128xf32, #tpu.memory_space<vmem>>, vector<1x128xf32>
    %44 = vector.broadcast %43 : vector<1x128xf32> to vector<128x128xf32>
    %45 = arith.mulf %42, %44 : vector<128x128xf32>
    %c0_24 = arith.constant 0 : index
    %c0_25 = arith.constant 0 : index
    %46 = vector.load %arg6[%c0_24, %c0_25] : memref<1x128xf32, #tpu.memory_space<vmem>>, vector<1x128xf32>
    %47 = vector.broadcast %46 : vector<1x128xf32> to vector<128x128xf32>
    %48 = arith.addf %45, %47 : vector<128x128xf32>
    %cst_26 = arith.constant 0.000000e+00 : f32
    %49 = vector.broadcast %cst_26 : f32 to vector<128x128xf32>
    %50 = arith.cmpf ogt, %48, %49 : vector<128x128xf32>
    %cst_27 = arith.constant 1.000000e-01 : f32
    %51 = vector.broadcast %cst_27 : f32 to vector<128x128xf32>
    %52 = arith.mulf %51, %48 : vector<128x128xf32>
    %53 = arith.select %50, %48, %52 : vector<128x128xi1>, vector<128x128xf32>
    %c0_28 = arith.constant 0 : index
    %c0_29 = arith.constant 0 : index
    %c0_30 = arith.constant 0 : index
    %54 = vector.load %arg7[%c0_28, %c0_29, %c0_30] : memref<1x128x128xf32, #tpu.memory_space<vmem>>, vector<1x128x128xf32>
    %55 = vector.shape_cast %54 : vector<1x128x128xf32> to vector<128x128xf32>
    %56 = vector.shape_cast %53 : vector<128x128xf32> to vector<1x128x128xf32>
    tpu.vector_store %arg7[%c0_28, %c0_29, %c0_30], %56 {strides = array<i32>} : memref<1x128x128xf32, #tpu.memory_space<vmem>>, vector<1x128x128xf32>,
    return
  }
  func.func @transform_0(%arg0: i32, %arg1: i32, %arg2: i32) -> (i32, i32, i32, i32) {
    %c0_i32 = arith.constant 0 : i32
    %c0_i32_0 = arith.constant 0 : i32
    %c0_i32_1 = arith.constant 0 : i32
    %c0_i32_2 = arith.constant 0 : i32
    return %arg0, %c0_i32, %c0_i32_0, %c0_i32_1 : i32, i32, i32, i32
  }
  func.func @transform_1(%arg0: i32, %arg1: i32, %arg2: i32) -> (i32, i32) {
    %c0_i32 = arith.constant 0 : i32
    %c0_i32_0 = arith.constant 0 : i32
    return %c0_i32, %arg2 : i32, i32
  }
  func.func @transform_2(%arg0: i32, %arg1: i32, %arg2: i32) -> (i32, i32) {
    %c0_i32 = arith.constant 0 : i32
    %c0_i32_0 = arith.constant 0 : i32
    return %c0_i32, %arg2 : i32, i32
  }
  func.func @transform_3(%arg0: i32, %arg1: i32, %arg2: i32) -> (i32, i32) {
    %c0_i32 = arith.constant 0 : i32
    %c0_i32_0 = arith.constant 0 : i32
    return %c0_i32, %arg2 : i32, i32
  }
  func.func @transform_4(%arg0: i32, %arg1: i32, %arg2: i32) -> (i32, i32, i32) {
    %c0_i32 = arith.constant 0 : i32
    return %arg0, %arg1, %arg2 : i32, i32, i32
  }
}

</mosaic_0001>

<llo_original>
// kernel: tpu_custom_call.1
$region0: #{tpu_custom_call.1}
  #allocation0 [shape = 'u32[]', space=smem, size = 0x4, offset = 0x4, fixed_abs, tag = 'smem constant byte address 0x4 - core index']
  #allocation1 [shape = 'u32[72,128]{1,0:T(1,128)}', space=vmem, size = 0x9000, scoped, tag = 'internal scratch']
  #allocation2 [shape = 'bf16[128,36]{1,0:T(8,128)(2,1)}', space=vmem, size = 0x8000, scoped, tag = 'scratch operand']
  %s0 = inlined_call_operand.vmem [shape: bf16[2,18,18,4], index: 0, kind: input, shape index: {}]
  %s1 = inlined_call_operand.vmem [shape: bf16[36,128], index: 1, kind: input, shape index: {}]
  %s2 = inlined_call_operand.vmem [shape: f32[1,128], index: 2, kind: input, shape index: {}]
  %s3 = inlined_call_operand.vmem [shape: f32[1,128], index: 3, kind: input, shape index: {}]
  %s4 = inlined_call_operand.hbm [shape: f32[2,256,128], index: 4, kind: output, shape index: {}]
  %s5 = sld [smem:[#allocation0]]
  $region49: #{tpu_custom_call.1} parent=0
    _
  %s7 = ssub.s32 1, %s5
  %s8 = scalar_select 0, %s7, %s5
  $region1: #{tpu_custom_call.1} parent=0
    #allocation3 [shape = 'u8[131072]{0}', space=vmem, size = 0x20000, scoped, tag = 'output window, operand 0']
    #allocation4 [shape = 's32[2]{0}', space=sflag, size = 0x8, scoped, tag = 'scoped memory for tpu_custom_call.1']
    %9 = vsyncpa [#allocation4], 0
    %s10 = scalar_lea.sflag [#allocation4], 1
    %11 = vsyncpa %s10, 0
    loop: start=0, step=1, limit=6
    $region2: #{tpu_custom_call.1} parent=1 // loop_pre_header
      _
    $region3: #{tpu_custom_call.1} parent=1 // loop_header
      %s13 = sphi 0, %s17
      %p14 = scmp.ge.s32.totalorder %s13, 6
      %s20 = sphi 0, %s39
      %s21 = sphi 0, %s35
      %s22 = sphi 0, %s31
      %s23 = sphi 0, %s20
      %s24 = sphi 0, %s21
      %s25 = sphi 0, %s22
      %s26 = sphi 0, %s23
      %s27 = sphi 0, %s24
      %s28 = sphi 0, %s25
      %s42 = sphi 0, %s44
      %s45 = sphi 0, %s42
      %s46 = sphi 0, %s45
      %s62 = sphi 0, %s46
      %s68 = sphi 0, %s70
      %s71 = sphi 0, %s68
      %s72 = sphi 0, %s71
      %s88 = sphi 0, %s72
      %s94 = sphi 0, %s96
      %s97 = sphi 0, %s94
      %s98 = sphi 0, %s97
      %s114 = sphi 0, %s98
      %s120 = sphi 0, %s122
      %s123 = sphi 0, %s120
      %s124 = sphi 0, %s123
      %s140 = sphi 0, %s124
      %s150 = sphi 0, %s152
      %s153 = sphi 0, %s150
      %s154 = sphi 0, %s153
      %s170 = sphi 0, %s154
    $region4: #{tpu_custom_call.1} parent=1 // loop_header_branch
      %16 = sbr.rel (%p14) target = $region8
    $region5: #{tpu_custom_call.1} parent=1 // loop_body
      %s18 = ssub.s32 %s13, 1
      %s19 = ssub.s32 %s13, 2
      %s29 = sadd.s32 1, %s22
      %p30 = scmp.ge.s32.totalorder %s29, 1
      %s31 = scalar_select %p30, 0, %s29
      %s32 = sadd.s32 1, %s21
      %s33 = scalar_select %p30, %s32, %s21
      %p34 = scmp.ge.s32.totalorder %s33, 2
      %s35 = scalar_select %p34, 0, %s33
      %s36 = sadd.s32 1, %s20
      %s37 = scalar_select %p34, %s36, %s20
      %p38 = scmp.ge.s32.totalorder %s37, 2
      %s39 = scalar_select %p38, 0, %s37
      %s40 = ssub.s32 %s20, %s39
      %p41 = scmp.eq.s32.totalorder %s40, 0
      %s43 = sadd.s32 %s42, 1
      %s44 = scalar_select %p41, %s42, %s43
      %p47 = pneg %p41
      %p48 = scmp.eq.s32.totalorder %s13, 3
      %p49 = por %p47, %p48
      %p50 = scmp.ne.s32.totalorder %s42, %s45
      %p51 = scmp.eq.s32.totalorder %s13, 0
      %p52 = por %p50, %p51
      %p53 = scmp.ne.s32.totalorder %s42, %s45
      %p54 = scmp.eq.s32.totalorder %s18, 3
      %p55 = por %p53, %p54
      %p56 = scmp.ne.s32.totalorder %s45, %s46
      %p57 = scmp.eq.s32.totalorder %s18, 0
      %p58 = por %p56, %p57
      %p59 = scmp.ne.s32.totalorder %s45, %s46
      %p60 = scmp.eq.s32.totalorder %s19, 3
      %p61 = por %p59, %p60
      %p63 = scmp.ne.s32.totalorder %s46, %s62
      %p64 = scmp.eq.s32.totalorder %s19, 0
      %p65 = por %p63, %p64
      %s66 = ssub.s32 %s22, %s31
      %p67 = scmp.eq.s32.totalorder %s66, 0
      %s69 = sadd.s32 %s68, 1
      %s70 = scalar_select %p67, %s68, %s69
      %p73 = pneg %p67
      %p74 = scmp.eq.s32.totalorder %s13, 3
      %p75 = por %p73, %p74
      %p76 = scmp.ne.s32.totalorder %s68, %s71
      %p77 = scmp.eq.s32.totalorder %s13, 0
      %p78 = por %p76, %p77
      %p79 = scmp.ne.s32.totalorder %s68, %s71
      %p80 = scmp.eq.s32.totalorder %s18, 3
      %p81 = por %p79, %p80
      %p82 = scmp.ne.s32.totalorder %s71, %s72
      %p83 = scmp.eq.s32.totalorder %s18, 0
      %p84 = por %p82, %p83
      %p85 = scmp.ne.s32.totalorder %s71, %s72
      %p86 = scmp.eq.s32.totalorder %s19, 3
      %p87 = por %p85, %p86
      %p89 = scmp.ne.s32.totalorder %s72, %s88
      %p90 = scmp.eq.s32.totalorder %s19, 0
      %p91 = por %p89, %p90
      %s92 = ssub.s32 %s22, %s31
      %p93 = scmp.eq.s32.totalorder %s92, 0
      %s95 = sadd.s32 %s94, 1
      %s96 = scalar_select %p93, %s94, %s95
      %p99 = pneg %p93
      %p100 = scmp.eq.s32.totalorder %s13, 3
      %p101 = por %p99, %p100
      %p102 = scmp.ne.s32.totalorder %s94, %s97
      %p103 = scmp.eq.s32.totalorder %s13, 0
      %p104 = por %p102, %p103
      %p105 = scmp.ne.s32.totalorder %s94, %s97
      %p106 = scmp.eq.s32.totalorder %s18, 3
      %p107 = por %p105, %p106
      %p108 = scmp.ne.s32.totalorder %s97, %s98
      %p109 = scmp.eq.s32.totalorder %s18, 0
      %p110 = por %p108, %p109
      %p111 = scmp.ne.s32.totalorder %s97, %s98
      %p112 = scmp.eq.s32.totalorder %s19, 3
      %p113 = por %p111, %p112
      %p115 = scmp.ne.s32.totalorder %s98, %s114
      %p116 = scmp.eq.s32.totalorder %s19, 0
      %p117 = por %p115, %p116
      %s118 = ssub.s32 %s22, %s31
      %p119 = scmp.eq.s32.totalorder %s118, 0
      %s121 = sadd.s32 %s120, 1
      %s122 = scalar_select %p119, %s120, %s121
      %p125 = pneg %p119
      %p126 = scmp.eq.s32.totalorder %s13, 3
      %p127 = por %p125, %p126
      %p128 = scmp.ne.s32.totalorder %s120, %s123
      %p129 = scmp.eq.s32.totalorder %s13, 0
      %p130 = por %p128, %p129
      %p131 = scmp.ne.s32.totalorder %s120, %s123
      %p132 = scmp.eq.s32.totalorder %s18, 3
      %p133 = por %p131, %p132
      %p134 = scmp.ne.s32.totalorder %s123, %s124
      %p135 = scmp.eq.s32.totalorder %s18, 0
      %p136 = por %p134, %p135
      %p137 = scmp.ne.s32.totalorder %s123, %s124
      %p138 = scmp.eq.s32.totalorder %s19, 3
      %p139 = por %p137, %p138
      %p141 = scmp.ne.s32.totalorder %s124, %s140
      %p142 = scmp.eq.s32.totalorder %s19, 0
      %p143 = por %p141, %p142
      %s144 = ssub.s32 %s20, %s39
      %s145 = ssub.s32 %s21, %s35
      %s146 = sor.u32 %s144, %s145
      %s147 = ssub.s32 %s22, %s31
      %s148 = sor.u32 %s146, %s147
      %p149 = scmp.eq.s32.totalorder %s148, 0
      %s151 = sadd.s32 %s150, 1
      %s152 = scalar_select %p149, %s150, %s151
      %p155 = pneg %p149
      %p156 = scmp.eq.s32.totalorder %s13, 3
      %p157 = por %p155, %p156
      %p158 = scmp.ne.s32.totalorder %s150, %s153
      %p159 = scmp.eq.s32.totalorder %s13, 0
      %p160 = por %p158, %p159
      %p161 = scmp.ne.s32.totalorder %s150, %s153
      %p162 = scmp.eq.s32.totalorder %s18, 3
      %p163 = por %p161, %p162
      %p164 = scmp.ne.s32.totalorder %s153, %s154
      %p165 = scmp.eq.s32.totalorder %s18, 0
      %p166 = por %p164, %p165
      %p167 = scmp.ne.s32.totalorder %s153, %s154
      %p168 = scmp.eq.s32.totalorder %s19, 3
      %p169 = por %p167, %p168
      %p171 = scmp.ne.s32.totalorder %s154, %s170
      %p172 = scmp.eq.s32.totalorder %s19, 0
      %p173 = por %p171, %p172
      %p174 = scmp.le.s32.totalorder 1, %s13
      %p175 = scmp.lt.s32.totalorder %s13, 5
      %p176 = pnand %p174, %p175
      %p177 = pneg %p176
      // Predicated region
      $region9: #{tpu_custom_call.1} parent=5 // pred_check
        _
      $region10: #{tpu_custom_call.1} parent=5 // pred_check_branch
        %179 = sbr.rel (%p176) target = $region12
      $region11: #{tpu_custom_call.1} parent=5 // pred_region
        %s180 = ssub.s32 %s13, 1
        // Predicated region
        $region13: #{tpu_custom_call.1} parent=11 // pred_check
          %p181 = pneg %p84
        $region14: #{tpu_custom_call.1} parent=11 // pred_check_branch
          %183 = sbr.rel (%p181) target = $region16
        $region15: #{tpu_custom_call.1} parent=11 // pred_region
          %p184 = scmp.lt.s32.totalorder %s25, 0
          %s185 = scalar_select %p184, %s25, 0
          %s186 = smul.addr %s185, 4
          %s187 = scalar_lea.vmem %s1, %s186
        $region16: #{tpu_custom_call.1} parent=11 // pred_fallthru
          _
        // Predicated region
        $region17: #{tpu_custom_call.1} parent=11 // pred_check
          %p188 = pneg %p110
        $region18: #{tpu_custom_call.1} parent=11 // pred_check_branch
          %190 = sbr.rel (%p188) target = $region20
        $region19: #{tpu_custom_call.1} parent=11 // pred_region
          %p191 = scmp.lt.s32.totalorder %s25, 0
          %s192 = scalar_select %p191, %s25, 0
          %s193 = scalar_lea.vmem %s2, %s192
        $region20: #{tpu_custom_call.1} parent=11 // pred_fallthru
          _
        // Predicated region
        $region21: #{tpu_custom_call.1} parent=11 // pred_check
          %p194 = pneg %p136
        $region22: #{tpu_custom_call.1} parent=11 // pred_check_branch
          %196 = sbr.rel (%p194) target = $region24
        $region23: #{tpu_custom_call.1} parent=11 // pred_region
          %p197 = scmp.lt.s32.totalorder %s25, 0
          %s198 = scalar_select %p197, %s25, 0
          %s199 = scalar_lea.vmem %s3, %s198
        $region24: #{tpu_custom_call.1} parent=11 // pred_fallthru
          _
      $region12: #{tpu_custom_call.1} parent=5 // pred_fallthru
        _
      %p200 = scmp.lt.s32.totalorder %s13, 4
      // Predicated region
      $region25: #{tpu_custom_call.1} parent=5 // pred_check
        %p201 = pneg %p200
      $region26: #{tpu_custom_call.1} parent=5 // pred_check_branch
        %203 = sbr.rel (%p201) target = $region28
      $region27: #{tpu_custom_call.1} parent=5 // pred_region
        // Predicated region
        $region29: #{tpu_custom_call.1} parent=27 // pred_check
          %p204 = pneg %p52
        $region30: #{tpu_custom_call.1} parent=27 // pred_check_branch
          %206 = sbr.rel (%p204) target = $region32
        $region31: #{tpu_custom_call.1} parent=27 // pred_region
          %p207 = scmp.lt.s32.totalorder %s20, 1
          %s208 = scalar_select %p207, %s20, 1
          %s209 = smul.addr %s208, 54
          %s210 = smul.addr %s209, 4
          %s211 = scalar_lea.vmem %s0, %s210
        $region32: #{tpu_custom_call.1} parent=27 // pred_fallthru
          _
      $region28: #{tpu_custom_call.1} parent=5 // pred_fallthru
        _
      %p212 = scmp.le.s32.totalorder 1, %s13
      %p213 = scmp.lt.s32.totalorder %s13, 5
      %p214 = pnand %p212, %p213
      %p215 = pneg %p214
      // Predicated region
      $region33: #{tpu_custom_call.1} parent=5 // pred_check
        _
      $region34: #{tpu_custom_call.1} parent=5 // pred_check_branch
        %217 = sbr.rel (%p214) target = $region36
      $region35: #{tpu_custom_call.1} parent=5 // pred_region
        %s218 = ssub.s32 %s13, 1
        %p219 = scmp.lt.s32.totalorder %s23, 1
        %s220 = scalar_select %p219, %s23, 1
        %s221 = smul.addr %s220, 54
        %s222 = smul.addr %s221, 4
        %s223 = scalar_lea.vmem %s0, %s222
        %p224 = pneg %p58
        %p225 = pneg %p55
        %p226 = scmp.lt.s32.totalorder %s25, 0
        %s227 = scalar_select %p226, %s25, 0
        %s228 = smul.addr %s227, 4
        %s229 = scalar_lea.vmem %s1, %s228
        %p230 = pneg %p84
        %p231 = pneg %p81
        %p232 = scmp.lt.s32.totalorder %s25, 0
        %s233 = scalar_select %p232, %s25, 0
        %s234 = scalar_lea.vmem %s2, %s233
        %p235 = pneg %p110
        %p236 = pneg %p107
        %p237 = scmp.lt.s32.totalorder %s25, 0
        %s238 = scalar_select %p237, %s25, 0
        %s239 = scalar_lea.vmem %s3, %s238
        %p240 = pneg %p136
        %p241 = pneg %p133
        %p242 = pneg %p166
        %p243 = pneg %p163
        %s244 = sand.u32 %s153, 1
        %s245 = scalar_lea.sflag [#allocation4], %s244
        %s246 = sand.u32 %s153, 1
        %s247 = smul.addr %s246, 128
        %s248 = scalar_lea.vmem [#allocation3], %s247
        %p249 = scmp.lt.s32.totalorder %s23, 1
        %s250 = scalar_select %p249, %s23, 1
        %s251 = smul.addr %s250, 54
        %s252 = smul.addr %s251, 4
        %s253 = scalar_lea.vmem %s0, %s252
        %p254 = scmp.lt.s32.totalorder %s25, 0
        %s255 = scalar_select %p254, %s25, 0
        %s256 = smul.addr %s255, 4
        %s257 = scalar_lea.vmem %s1, %s256
        %p258 = scmp.lt.s32.totalorder %s25, 0
        %s259 = scalar_select %p258, %s25, 0
        %s260 = scalar_lea.vmem %s2, %s259
        %p261 = scmp.lt.s32.totalorder %s25, 0
        %s262 = scalar_select %p261, %s25, 0
        %s263 = scalar_lea.vmem %s3, %s262
        %s264 = smul.u32 16, %s24
        %s266 = smul.u32 %s24, 8
        %s267 = smul.u32 %s266, 3
        %s268 = smul.addr %s267, 4
        %s269 = scalar_lea.vmem %s253, %s268
        %v270 = vld [vmem:[%s269] sm:$0xf]
        %v271 = vld [vmem:[%s269 + $0x4] sm:$0xf]
        %v272 = vld [vmem:[%s269 + $0x8] sm:$0x1]
        %v273 = vld [vmem:[%s269 + $0xc] sm:$0xf]
        %v274 = vld [vmem:[%s269 + $0x10] sm:$0xf]
        %v275 = vld [vmem:[%s269 + $0x14] sm:$0x1]
        %v276 = vld [vmem:[%s269 + $0x18] sm:$0xf]
        %v277 = vld [vmem:[%s269 + $0x1c] sm:$0xf]
        %v278 = vld [vmem:[%s269 + $0x20] sm:$0x1]
        %v279 = vld [vmem:[%s269 + $0x24] sm:$0xf]
        %v280 = vld [vmem:[%s269 + $0x28] sm:$0xf]
        %v281 = vld [vmem:[%s269 + $0x2c] sm:$0x1]
        %v282 = vld [vmem:[%s269 + $0x30] sm:$0xf]
        %v283 = vld [vmem:[%s269 + $0x34] sm:$0xf]
        %v284 = vld [vmem:[%s269 + $0x38] sm:$0x1]
        %v285 = vld [vmem:[%s269 + $0x3c] sm:$0xf]
        %v286 = vld [vmem:[%s269 + $0x40] sm:$0xf]
        %v287 = vld [vmem:[%s269 + $0x44] sm:$0x1]
        %v288 = vld [vmem:[%s269 + $0x48] sm:$0xf]
        %v289 = vld [vmem:[%s269 + $0x4c] sm:$0xf]
        %v290 = vld [vmem:[%s269 + $0x50] sm:$0x1]
        %v291 = vld [vmem:[%s269 + $0x54] sm:$0xf]
        %v292 = vld [vmem:[%s269 + $0x58] sm:$0xf]
        %v293 = vld [vmem:[%s269 + $0x5c] sm:$0x1]
        %vm294 = vcmask 27648
        %295 = vst.msk [vmem:[#allocation2] sm:$0xf] %vm294, %v270
        %296 = vst.msk [vmem:[#allocation2 + $0x4] sm:$0xf] %vm294, %v271
        %297 = vst.msk [vmem:[#allocation2 + $0x8] sm:$0xf] %vm294, %v273
        %298 = vst.msk [vmem:[#allocation2 + $0xc] sm:$0xf] %vm294, %v274
        %299 = vst.msk [vmem:[#allocation2 + $0x10] sm:$0xf] %vm294, %v276
        %300 = vst.msk [vmem:[#allocation2 + $0x14] sm:$0xf] %vm294, %v277
        %301 = vst.msk [vmem:[#allocation2 + $0x18] sm:$0xf] %vm294, %v279
        %302 = vst.msk [vmem:[#allocation2 + $0x1c] sm:$0xf] %vm294, %v280
        %303 = vst.msk [vmem:[#allocation2 + $0x20] sm:$0xf] %vm294, %v282
        %304 = vst.msk [vmem:[#allocation2 + $0x24] sm:$0xf] %vm294, %v283
        %305 = vst.msk [vmem:[#allocation2 + $0x28] sm:$0xf] %vm294, %v285
        %306 = vst.msk [vmem:[#allocation2 + $0x2c] sm:$0xf] %vm294, %v286
        %307 = vst.msk [vmem:[#allocation2 + $0x30] sm:$0xf] %vm294, %v288
        %308 = vst.msk [vmem:[#allocation2 + $0x34] sm:$0xf] %vm294, %v289
        %309 = vst.msk [vmem:[#allocation2 + $0x38] sm:$0xf] %vm294, %v291
        %310 = vst.msk [vmem:[#allocation2 + $0x3c] sm:$0xf] %vm294, %v292
        %vm311 = vsmask.f32 3328
        %vm312 = vsmask.f32 7440
        %vm313 = vmor %vm311, %vm312
        %v315 = vshrl.u32 %v270, 16
        %v317 = vrot.slane %v315, 4
        %v318 = vshll.u32 %v270, 16
        %v320 = vrot.slane %v318, 5
        %v321 = vor.u32 %v317, %v320
        %v322 = vrot.slane %v321, 4
        %v324 = vshll.u32 %v271, 16
        %v326 = vrot.slane %v324, 5
        %v327 = vsel %vm313, %v322, %v326
        %v328 = vshrl.u32 %v271, 16
        %v330 = vrot.slane %v328, 4
        %v331 = vor.u32 %v330, %v326
        %v332 = vrot.slane %v331, 4
        %v334 = vshll.u32 %v272, 16
        %v336 = vrot.slane %v334, 5
        %v337 = vsel %vm313, %v332, %v336
        %v339 = vshrl.u32 %v273, 16
        %v341 = vrot.slane %v339, 4
        %v342 = vshll.u32 %v273, 16
        %v344 = vrot.slane %v342, 5
        %v345 = vor.u32 %v341, %v344
        %v346 = vrot.slane %v345, 4
        %v348 = vshll.u32 %v274, 16
        %v350 = vrot.slane %v348, 5
        %v351 = vsel %vm313, %v346, %v350
        %v352 = vshrl.u32 %v274, 16
        %v354 = vrot.slane %v352, 4
        %v355 = vor.u32 %v354, %v350
        %v356 = vrot.slane %v355, 4
        %v358 = vshll.u32 %v275, 16
        %v360 = vrot.slane %v358, 5
        %v361 = vsel %vm313, %v356, %v360
        %v363 = vshrl.u32 %v276, 16
        %v365 = vrot.slane %v363, 4
        %v366 = vshll.u32 %v276, 16
        %v368 = vrot.slane %v366, 5
        %v369 = vor.u32 %v365, %v368
        %v370 = vrot.slane %v369, 4
        %v372 = vshll.u32 %v277, 16
        %v374 = vrot.slane %v372, 5
        %v375 = vsel %vm313, %v370, %v374
        %v376 = vshrl.u32 %v277, 16
        %v378 = vrot.slane %v376, 4
        %v379 = vor.u32 %v378, %v374
        %v380 = vrot.slane %v379, 4
        %v382 = vshll.u32 %v278, 16
        %v384 = vrot.slane %v382, 5
        %v385 = vsel %vm313, %v380, %v384
        %v387 = vshrl.u32 %v279, 16
        %v389 = vrot.slane %v387, 4
        %v390 = vshll.u32 %v279, 16
        %v392 = vrot.slane %v390, 5
        %v393 = vor.u32 %v389, %v392
        %v394 = vrot.slane %v393, 4
        %v396 = vshll.u32 %v280, 16
        %v398 = vrot.slane %v396, 5
        %v399 = vsel %vm313, %v394, %v398
        %v400 = vshrl.u32 %v280, 16
        %v402 = vrot.slane %v400, 4
        %v403 = vor.u32 %v402, %v398
        %v404 = vrot.slane %v403, 4
        %v406 = vshll.u32 %v281, 16
        %v408 = vrot.slane %v406, 5
        %v409 = vsel %vm313, %v404, %v408
        %v411 = vshrl.u32 %v282, 16
        %v413 = vrot.slane %v411, 4
        %v414 = vshll.u32 %v282, 16
        %v416 = vrot.slane %v414, 5
        %v417 = vor.u32 %v413, %v416
        %v418 = vrot.slane %v417, 4
        %v420 = vshll.u32 %v283, 16
        %v422 = vrot.slane %v420, 5
        %v423 = vsel %vm313, %v418, %v422
        %v424 = vshrl.u32 %v283, 16
        %v426 = vrot.slane %v424, 4
        %v427 = vor.u32 %v426, %v422
        %v428 = vrot.slane %v427, 4
        %v430 = vshll.u32 %v284, 16
        %v432 = vrot.slane %v430, 5
        %v433 = vsel %vm313, %v428, %v432
        %v435 = vshrl.u32 %v285, 16
        %v437 = vrot.slane %v435, 4
        %v438 = vshll.u32 %v285, 16
        %v440 = vrot.slane %v438, 5
        %v441 = vor.u32 %v437, %v440
        %v442 = vrot.slane %v441, 4
        %v444 = vshll.u32 %v286, 16
        %v446 = vrot.slane %v444, 5
        %v447 = vsel %vm313, %v442, %v446
        %v448 = vshrl.u32 %v286, 16
        %v450 = vrot.slane %v448, 4
        %v451 = vor.u32 %v450, %v446
        %v452 = vrot.slane %v451, 4
        %v454 = vshll.u32 %v287, 16
        %v456 = vrot.slane %v454, 5
        %v457 = vsel %vm313, %v452, %v456
        %v459 = vshrl.u32 %v288, 16
        %v461 = vrot.slane %v459, 4
        %v462 = vshll.u32 %v288, 16
        %v464 = vrot.slane %v462, 5
        %v465 = vor.u32 %v461, %v464
        %v466 = vrot.slane %v465, 4
        %v468 = vshll.u32 %v289, 16
        %v470 = vrot.slane %v468, 5
        %v471 = vsel %vm313, %v466, %v470
        %v472 = vshrl.u32 %v289, 16
        %v474 = vrot.slane %v472, 4
        %v475 = vor.u32 %v474, %v470
        %v476 = vrot.slane %v475, 4
        %v478 = vshll.u32 %v290, 16
        %v480 = vrot.slane %v478, 5
        %v481 = vsel %vm313, %v476, %v480
        %v483 = vshrl.u32 %v291, 16
        %v485 = vrot.slane %v483, 4
        %v486 = vshll.u32 %v291, 16
        %v488 = vrot.slane %v486, 5
        %v489 = vor.u32 %v485, %v488
        %v490 = vrot.slane %v489, 4
        %v492 = vshll.u32 %v292, 16
        %v494 = vrot.slane %v492, 5
        %v495 = vsel %vm313, %v490, %v494
        %v496 = vshrl.u32 %v292, 16
        %v498 = vrot.slane %v496, 4
        %v499 = vor.u32 %v498, %v494
        %v500 = vrot.slane %v499, 4
        %v502 = vshll.u32 %v293, 16
        %v504 = vrot.slane %v502, 5
        %v505 = vsel %vm313, %v500, %v504
        %506 = vrot.lane.b32.xlu0 %v327, 4
        %v507 = vpop.permute.xlu0 %506
        %508 = vrot.lane.b32.xlu0 %v337, 4
        %v509 = vpop.permute.xlu0 %508
        %510 = vrot.lane.b32.xlu0 %v351, 4
        %v511 = vpop.permute.xlu0 %510
        %512 = vrot.lane.b32.xlu0 %v361, 4
        %v513 = vpop.permute.xlu0 %512
        %514 = vrot.lane.b32.xlu0 %v375, 4
        %v515 = vpop.permute.xlu0 %514
        %516 = vrot.lane.b32.xlu0 %v385, 4
        %v517 = vpop.permute.xlu0 %516
        %518 = vrot.lane.b32.xlu0 %v399, 4
        %v519 = vpop.permute.xlu0 %518
        %520 = vrot.lane.b32.xlu0 %v409, 4
        %v521 = vpop.permute.xlu0 %520
        %522 = vrot.lane.b32.xlu0 %v423, 4
        %v523 = vpop.permute.xlu0 %522
        %524 = vrot.lane.b32.xlu0 %v433, 4
        %v525 = vpop.permute.xlu0 %524
        %526 = vrot.lane.b32.xlu0 %v447, 4
        %v527 = vpop.permute.xlu0 %526
        %528 = vrot.lane.b32.xlu0 %v457, 4
        %v529 = vpop.permute.xlu0 %528
        %530 = vrot.lane.b32.xlu0 %v471, 4
        %v531 = vpop.permute.xlu0 %530
        %532 = vrot.lane.b32.xlu0 %v481, 4
        %v533 = vpop.permute.xlu0 %532
        %534 = vrot.lane.b32.xlu0 %v495, 4
        %v535 = vpop.permute.xlu0 %534
        %536 = vrot.lane.b32.xlu0 %v505, 4
        %v537 = vpop.permute.xlu0 %536
        %vm554 = vcmask 60448
        %555 = vst.msk [vmem:[#allocation2] sm:$0xf] %vm554, %v507
        %556 = vst.msk [vmem:[#allocation2 + $0x4] sm:$0xf] %vm554, %v509
        %557 = vst.msk [vmem:[#allocation2 + $0x8] sm:$0xf] %vm554, %v511
        %558 = vst.msk [vmem:[#allocation2 + $0xc] sm:$0xf] %vm554, %v513
        %559 = vst.msk [vmem:[#allocation2 + $0x10] sm:$0xf] %vm554, %v515
        %560 = vst.msk [vmem:[#allocation2 + $0x14] sm:$0xf] %vm554, %v517
        %561 = vst.msk [vmem:[#allocation2 + $0x18] sm:$0xf] %vm554, %v519
        %562 = vst.msk [vmem:[#allocation2 + $0x1c] sm:$0xf] %vm554, %v521
        %563 = vst.msk [vmem:[#allocation2 + $0x20] sm:$0xf] %vm554, %v523
        %564 = vst.msk [vmem:[#allocation2 + $0x24] sm:$0xf] %vm554, %v525
        %565 = vst.msk [vmem:[#allocation2 + $0x28] sm:$0xf] %vm554, %v527
        %566 = vst.msk [vmem:[#allocation2 + $0x2c] sm:$0xf] %vm554, %v529
        %567 = vst.msk [vmem:[#allocation2 + $0x30] sm:$0xf] %vm554, %v531
        %568 = vst.msk [vmem:[#allocation2 + $0x34] sm:$0xf] %vm554, %v533
        %569 = vst.msk [vmem:[#allocation2 + $0x38] sm:$0xf] %vm554, %v535
        %570 = vst.msk [vmem:[#allocation2 + $0x3c] sm:$0xf] %vm554, %v537
        %vm595 = vcmask 1042432
        %vm596 = vcmask 1046532
        %vm597 = vmor %vm595, %vm596
        %v598 = vrot.slane %v270, 5
        %v599 = vrot.slane %v598, 4
        %v600 = vrot.slane %v271, 5
        %v601 = vsel %vm597, %v599, %v600
        %v602 = vrot.slane %v600, 4
        %v603 = vrot.slane %v272, 5
        %v604 = vsel %vm597, %v602, %v603
        %v605 = vrot.slane %v273, 5
        %v606 = vrot.slane %v605, 4
        %v607 = vrot.slane %v274, 5
        %v608 = vsel %vm597, %v606, %v607
        %v609 = vrot.slane %v607, 4
        %v610 = vrot.slane %v275, 5
        %v611 = vsel %vm597, %v609, %v610
        %v612 = vrot.slane %v276, 5
        %v613 = vrot.slane %v612, 4
        %v614 = vrot.slane %v277, 5
        %v615 = vsel %vm597, %v613, %v614
        %v616 = vrot.slane %v614, 4
        %v617 = vrot.slane %v278, 5
        %v618 = vsel %vm597, %v616, %v617
        %v619 = vrot.slane %v279, 5
        %v620 = vrot.slane %v619, 4
        %v621 = vrot.slane %v280, 5
        %v622 = vsel %vm597, %v620, %v621
        %v623 = vrot.slane %v621, 4
        %v624 = vrot.slane %v281, 5
        %v625 = vsel %vm597, %v623, %v624
        %v626 = vrot.slane %v282, 5
        %v627 = vrot.slane %v626, 4
        %v628 = vrot.slane %v283, 5
        %v629 = vsel %vm597, %v627, %v628
        %v630 = vrot.slane %v628, 4
        %v631 = vrot.slane %v284, 5
        %v632 = vsel %vm597, %v630, %v631
        %v633 = vrot.slane %v285, 5
        %v634 = vrot.slane %v633, 4
        %v635 = vrot.slane %v286, 5
        %v636 = vsel %vm597, %v634, %v635
        %v637 = vrot.slane %v635, 4
        %v638 = vrot.slane %v287, 5
        %v639 = vsel %vm597, %v637, %v638
        %v640 = vrot.slane %v288, 5
        %v641 = vrot.slane %v640, 4
        %v642 = vrot.slane %v289, 5
        %v643 = vsel %vm597, %v641, %v642
        %v644 = vrot.slane %v642, 4
        %v645 = vrot.slane %v290, 5
        %v646 = vsel %vm597, %v644, %v645
        %v647 = vrot.slane %v291, 5
        %v648 = vrot.slane %v647, 4
        %v649 = vrot.slane %v292, 5
        %v650 = vsel %vm597, %v648, %v649
        %v651 = vrot.slane %v649, 4
        %v652 = vrot.slane %v293, 5
        %v653 = vsel %vm597, %v651, %v652
        %654 = vrot.lane.b32.xlu0 %v601, 8
        %v655 = vpop.permute.xlu0 %654
        %656 = vrot.lane.b32.xlu0 %v604, 8
        %v657 = vpop.permute.xlu0 %656
        %658 = vrot.lane.b32.xlu0 %v608, 8
        %v659 = vpop.permute.xlu0 %658
        %660 = vrot.lane.b32.xlu0 %v611, 8
        %v661 = vpop.permute.xlu0 %660
        %662 = vrot.lane.b32.xlu0 %v615, 8
        %v663 = vpop.permute.xlu0 %662
        %664 = vrot.lane.b32.xlu0 %v618, 8
        %v665 = vpop.permute.xlu0 %664
        %666 = vrot.lane.b32.xlu0 %v622, 8
        %v667 = vpop.permute.xlu0 %666
        %668 = vrot.lane.b32.xlu0 %v625, 8
        %v669 = vpop.permute.xlu0 %668
        %670 = vrot.lane.b32.xlu0 %v629, 8
        %v671 = vpop.permute.xlu0 %670
        %672 = vrot.lane.b32.xlu0 %v632, 8
        %v673 = vpop.permute.xlu0 %672
        %674 = vrot.lane.b32.xlu0 %v636, 8
        %v675 = vpop.permute.xlu0 %674
        %676 = vrot.lane.b32.xlu0 %v639, 8
        %v677 = vpop.permute.xlu0 %676
        %678 = vrot.lane.b32.xlu0 %v643, 8
        %v679 = vpop.permute.xlu0 %678
        %680 = vrot.lane.b32.xlu0 %v646, 8
        %v681 = vpop.permute.xlu0 %680
        %682 = vrot.lane.b32.xlu0 %v650, 8
        %v683 = vpop.permute.xlu0 %682
        %684 = vrot.lane.b32.xlu0 %v653, 8
        %v685 = vpop.permute.xlu0 %684
        %vm702 = vcmask 93248
        %703 = vst.msk [vmem:[#allocation2] sm:$0xf] %vm702, %v655
        %704 = vst.msk [vmem:[#allocation2 + $0x4] sm:$0xf] %vm702, %v657
        %705 = vst.msk [vmem:[#allocation2 + $0x8] sm:$0xf] %vm702, %v659
        %706 = vst.msk [vmem:[#allocation2 + $0xc] sm:$0xf] %vm702, %v661
        %707 = vst.msk [vmem:[#allocation2 + $0x10] sm:$0xf] %vm702, %v663
        %708 = vst.msk [vmem:[#allocation2 + $0x14] sm:$0xf] %vm702, %v665
        %709 = vst.msk [vmem:[#allocation2 + $0x18] sm:$0xf] %vm702, %v667
        %710 = vst.msk [vmem:[#allocation2 + $0x1c] sm:$0xf] %vm702, %v669
        %711 = vst.msk [vmem:[#allocation2 + $0x20] sm:$0xf] %vm702, %v671
        %712 = vst.msk [vmem:[#allocation2 + $0x24] sm:$0xf] %vm702, %v673
        %713 = vst.msk [vmem:[#allocation2 + $0x28] sm:$0xf] %vm702, %v675
        %714 = vst.msk [vmem:[#allocation2 + $0x2c] sm:$0xf] %vm702, %v677
        %715 = vst.msk [vmem:[#allocation2 + $0x30] sm:$0xf] %vm702, %v679
        %716 = vst.msk [vmem:[#allocation2 + $0x34] sm:$0xf] %vm702, %v681
        %717 = vst.msk [vmem:[#allocation2 + $0x38] sm:$0xf] %vm702, %v683
        %718 = vst.msk [vmem:[#allocation2 + $0x3c] sm:$0xf] %vm702, %v685
        %s719 = sadd.s32 %s266, 1
        %s720 = smul.u32 %s719, 3
        %s721 = smul.addr %s720, 4
        %s722 = scalar_lea.vmem %s253, %s721
        %v723 = vld [vmem:[%s722] sm:$0xf]
        %v724 = vld [vmem:[%s722 + $0x4] sm:$0xf]
        %v725 = vld [vmem:[%s722 + $0x8] sm:$0x1]
        %v726 = vld [vmem:[%s722 + $0xc] sm:$0xf]
        %v727 = vld [vmem:[%s722 + $0x10] sm:$0xf]
        %v728 = vld [vmem:[%s722 + $0x14] sm:$0x1]
        %v729 = vld [vmem:[%s722 + $0x18] sm:$0xf]
        %v730 = vld [vmem:[%s722 + $0x1c] sm:$0xf]
        %v731 = vld [vmem:[%s722 + $0x20] sm:$0x1]
        %v732 = vld [vmem:[%s722 + $0x24] sm:$0xf]
        %v733 = vld [vmem:[%s722 + $0x28] sm:$0xf]
        %v734 = vld [vmem:[%s722 + $0x2c] sm:$0x1]
        %v735 = vld [vmem:[%s722 + $0x30] sm:$0xf]
        %v736 = vld [vmem:[%s722 + $0x34] sm:$0xf]
        %v737 = vld [vmem:[%s722 + $0x38] sm:$0x1]
        %v738 = vld [vmem:[%s722 + $0x3c] sm:$0xf]
        %v739 = vld [vmem:[%s722 + $0x40] sm:$0xf]
        %v740 = vld [vmem:[%s722 + $0x44] sm:$0x1]
        %v741 = vld [vmem:[%s722 + $0x48] sm:$0xf]
        %v742 = vld [vmem:[%s722 + $0x4c] sm:$0xf]
        %v743 = vld [vmem:[%s722 + $0x50] sm:$0x1]
        %v744 = vld [vmem:[%s722 + $0x54] sm:$0xf]
        %v745 = vld [vmem:[%s722 + $0x58] sm:$0xf]
        %v746 = vld [vmem:[%s722 + $0x5c] sm:$0x1]
        %763 = vrot.lane.b32.xlu0 %v723, 12
        %v764 = vpop.permute.xlu0 %763
        %765 = vrot.lane.b32.xlu0 %v724, 12
        %v766 = vpop.permute.xlu0 %765
        %767 = vrot.lane.b32.xlu0 %v726, 12
        %v768 = vpop.permute.xlu0 %767
        %769 = vrot.lane.b32.xlu0 %v727, 12
        %v770 = vpop.permute.xlu0 %769
        %771 = vrot.lane.b32.xlu0 %v729, 12
        %v772 = vpop.permute.xlu0 %771
        %773 = vrot.lane.b32.xlu0 %v730, 12
        %v774 = vpop.permute.xlu0 %773
        %775 = vrot.lane.b32.xlu0 %v732, 12
        %v776 = vpop.permute.xlu0 %775
        %777 = vrot.lane.b32.xlu0 %v733, 12
        %v778 = vpop.permute.xlu0 %777
        %779 = vrot.lane.b32.xlu0 %v735, 12
        %v780 = vpop.permute.xlu0 %779
        %781 = vrot.lane.b32.xlu0 %v736, 12
        %v782 = vpop.permute.xlu0 %781
        %783 = vrot.lane.b32.xlu0 %v738, 12
        %v784 = vpop.permute.xlu0 %783
        %785 = vrot.lane.b32.xlu0 %v739, 12
        %v786 = vpop.permute.xlu0 %785
        %787 = vrot.lane.b32.xlu0 %v741, 12
        %v788 = vpop.permute.xlu0 %787
        %789 = vrot.lane.b32.xlu0 %v742, 12
        %v790 = vpop.permute.xlu0 %789
        %791 = vrot.lane.b32.xlu0 %v744, 12
        %v792 = vpop.permute.xlu0 %791
        %793 = vrot.lane.b32.xlu0 %v745, 12
        %v794 = vpop.permute.xlu0 %793
        %vm811 = vcmask 126048
        %812 = vst.msk [vmem:[#allocation2] sm:$0xf] %vm811, %v764
        %813 = vst.msk [vmem:[#allocation2 + $0x4] sm:$0xf] %vm811, %v766
        %814 = vst.msk [vmem:[#allocation2 + $0x8] sm:$0xf] %vm811, %v768
        %815 = vst.msk [vmem:[#allocation2 + $0xc] sm:$0xf] %vm811, %v770
        %816 = vst.msk [vmem:[#allocation2 + $0x10] sm:$0xf] %vm811, %v772
        %817 = vst.msk [vmem:[#allocation2 + $0x14] sm:$0xf] %vm811, %v774
        %818 = vst.msk [vmem:[#allocation2 + $0x18] sm:$0xf] %vm811, %v776
        %819 = vst.msk [vmem:[#allocation2 + $0x1c] sm:$0xf] %vm811, %v778
        %820 = vst.msk [vmem:[#allocation2 + $0x20] sm:$0xf] %vm811, %v780
        %821 = vst.msk [vmem:[#allocation2 + $0x24] sm:$0xf] %vm811, %v782
        %822 = vst.msk [vmem:[#allocation2 + $0x28] sm:$0xf] %vm811, %v784
        %823 = vst.msk [vmem:[#allocation2 + $0x2c] sm:$0xf] %vm811, %v786
        %824 = vst.msk [vmem:[#allocation2 + $0x30] sm:$0xf] %vm811, %v788
        %825 = vst.msk [vmem:[#allocation2 + $0x34] sm:$0xf] %vm811, %v790
        %826 = vst.msk [vmem:[#allocation2 + $0x38] sm:$0xf] %vm811, %v792
        %827 = vst.msk [vmem:[#allocation2 + $0x3c] sm:$0xf] %vm811, %v794
        %v829 = vshrl.u32 %v723, 16
        %v831 = vrot.slane %v829, 4
        %v832 = vshll.u32 %v723, 16
        %v834 = vrot.slane %v832, 5
        %v835 = vor.u32 %v831, %v834
        %v836 = vrot.slane %v835, 4
        %v838 = vshll.u32 %v724, 16
        %v840 = vrot.slane %v838, 5
        %v841 = vsel %vm313, %v836, %v840
        %v842 = vshrl.u32 %v724, 16
        %v844 = vrot.slane %v842, 4
        %v845 = vor.u32 %v844, %v840
        %v846 = vrot.slane %v845, 4
        %v848 = vshll.u32 %v725, 16
        %v850 = vrot.slane %v848, 5
        %v851 = vsel %vm313, %v846, %v850
        %v853 = vshrl.u32 %v726, 16
        %v855 = vrot.slane %v853, 4
        %v856 = vshll.u32 %v726, 16
        %v858 = vrot.slane %v856, 5
        %v859 = vor.u32 %v855, %v858
        %v860 = vrot.slane %v859, 4
        %v862 = vshll.u32 %v727, 16
        %v864 = vrot.slane %v862, 5
        %v865 = vsel %vm313, %v860, %v864
        %v866 = vshrl.u32 %v727, 16
        %v868 = vrot.slane %v866, 4
        %v869 = vor.u32 %v868, %v864
        %v870 = vrot.slane %v869, 4
        %v872 = vshll.u32 %v728, 16
        %v874 = vrot.slane %v872, 5
        %v875 = vsel %vm313, %v870, %v874
        %v877 = vshrl.u32 %v729, 16
        %v879 = vrot.slane %v877, 4
        %v880 = vshll.u32 %v729, 16
        %v882 = vrot.slane %v880, 5
        %v883 = vor.u32 %v879, %v882
        %v884 = vrot.slane %v883, 4
        %v886 = vshll.u32 %v730, 16
        %v888 = vrot.slane %v886, 5
        %v889 = vsel %vm313, %v884, %v888
        %v890 = vshrl.u32 %v730, 16
        %v892 = vrot.slane %v890, 4
        %v893 = vor.u32 %v892, %v888
        %v894 = vrot.slane %v893, 4
        %v896 = vshll.u32 %v731, 16
        %v898 = vrot.slane %v896, 5
        %v899 = vsel %vm313, %v894, %v898
        %v901 = vshrl.u32 %v732, 16
        %v903 = vrot.slane %v901, 4
        %v904 = vshll.u32 %v732, 16
        %v906 = vrot.slane %v904, 5
        %v907 = vor.u32 %v903, %v906
        %v908 = vrot.slane %v907, 4
        %v910 = vshll.u32 %v733, 16
        %v912 = vrot.slane %v910, 5
        %v913 = vsel %vm313, %v908, %v912
        %v914 = vshrl.u32 %v733, 16
        %v916 = vrot.slane %v914, 4
        %v917 = vor.u32 %v916, %v912
        %v918 = vrot.slane %v917, 4
        %v920 = vshll.u32 %v734, 16
        %v922 = vrot.slane %v920, 5
        %v923 = vsel %vm313, %v918, %v922
        %v925 = vshrl.u32 %v735, 16
        %v927 = vrot.slane %v925, 4
        %v928 = vshll.u32 %v735, 16
        %v930 = vrot.slane %v928, 5
        %v931 = vor.u32 %v927, %v930
        %v932 = vrot.slane %v931, 4
        %v934 = vshll.u32 %v736, 16
        %v936 = vrot.slane %v934, 5
        %v937 = vsel %vm313, %v932, %v936
        %v938 = vshrl.u32 %v736, 16
        %v940 = vrot.slane %v938, 4
        %v941 = vor.u32 %v940, %v936
        %v942 = vrot.slane %v941, 4
        %v944 = vshll.u32 %v737, 16
        %v946 = vrot.slane %v944, 5
        %v947 = vsel %vm313, %v942, %v946
        %v949 = vshrl.u32 %v738, 16
        %v951 = vrot.slane %v949, 4
        %v952 = vshll.u32 %v738, 16
        %v954 = vrot.slane %v952, 5
        %v955 = vor.u32 %v951, %v954
        %v956 = vrot.slane %v955, 4
        %v958 = vshll.u32 %v739, 16
        %v960 = vrot.slane %v958, 5
        %v961 = vsel %vm313, %v956, %v960
        %v962 = vshrl.u32 %v739, 16
        %v964 = vrot.slane %v962, 4
        %v965 = vor.u32 %v964, %v960
        %v966 = vrot.slane %v965, 4
        %v968 = vshll.u32 %v740, 16
        %v970 = vrot.slane %v968, 5
        %v971 = vsel %vm313, %v966, %v970
        %v973 = vshrl.u32 %v741, 16
        %v975 = vrot.slane %v973, 4
        %v976 = vshll.u32 %v741, 16
        %v978 = vrot.slane %v976, 5
        %v979 = vor.u32 %v975, %v978
        %v980 = vrot.slane %v979, 4
        %v982 = vshll.u32 %v742, 16
        %v984 = vrot.slane %v982, 5
        %v985 = vsel %vm313, %v980, %v984
        %v986 = vshrl.u32 %v742, 16
        %v988 = vrot.slane %v986, 4
        %v989 = vor.u32 %v988, %v984
        %v990 = vrot.slane %v989, 4
        %v992 = vshll.u32 %v743, 16
        %v994 = vrot.slane %v992, 5
        %v995 = vsel %vm313, %v990, %v994
        %v997 = vshrl.u32 %v744, 16
        %v999 = vrot.slane %v997, 4
        %v1000 = vshll.u32 %v744, 16
        %v1002 = vrot.slane %v1000, 5
        %v1003 = vor.u32 %v999, %v1002
        %v1004 = vrot.slane %v1003, 4
        %v1006 = vshll.u32 %v745, 16
        %v1008 = vrot.slane %v1006, 5
        %v1009 = vsel %vm313, %v1004, %v1008
        %v1010 = vshrl.u32 %v745, 16
        %v1012 = vrot.slane %v1010, 4
        %v1013 = vor.u32 %v1012, %v1008
        %v1014 = vrot.slane %v1013, 4
        %v1016 = vshll.u32 %v746, 16
        %v1018 = vrot.slane %v1016, 5
        %v1019 = vsel %vm313, %v1014, %v1018
        %1020 = vrot.lane.b32.xlu0 %v841, 16
        %v1021 = vpop.permute.xlu0 %1020
        %1022 = vrot.lane.b32.xlu0 %v851, 16
        %v1023 = vpop.permute.xlu0 %1022
        %1024 = vrot.lane.b32.xlu0 %v865, 16
        %v1025 = vpop.permute.xlu0 %1024
        %1026 = vrot.lane.b32.xlu0 %v875, 16
        %v1027 = vpop.permute.xlu0 %1026
        %1028 = vrot.lane.b32.xlu0 %v889, 16
        %v1029 = vpop.permute.xlu0 %1028
        %1030 = vrot.lane.b32.xlu0 %v899, 16
        %v1031 = vpop.permute.xlu0 %1030
        %1032 = vrot.lane.b32.xlu0 %v913, 16
        %v1033 = vpop.permute.xlu0 %1032
        %1034 = vrot.lane.b32.xlu0 %v923, 16
        %v1035 = vpop.permute.xlu0 %1034
        %1036 = vrot.lane.b32.xlu0 %v937, 16
        %v1037 = vpop.permute.xlu0 %1036
        %1038 = vrot.lane.b32.xlu0 %v947, 16
        %v1039 = vpop.permute.xlu0 %1038
        %1040 = vrot.lane.b32.xlu0 %v961, 16
        %v1041 = vpop.permute.xlu0 %1040
        %1042 = vrot.lane.b32.xlu0 %v971, 16
        %v1043 = vpop.permute.xlu0 %1042
        %1044 = vrot.lane.b32.xlu0 %v985, 16
        %v1045 = vpop.permute.xlu0 %1044
        %1046 = vrot.lane.b32.xlu0 %v995, 16
        %v1047 = vpop.permute.xlu0 %1046
        %1048 = vrot.lane.b32.xlu0 %v1009, 16
        %v1049 = vpop.permute.xlu0 %1048
        %1050 = vrot.lane.b32.xlu0 %v1019, 16
        %v1051 = vpop.permute.xlu0 %1050
        %vm1068 = vcmask 158848
        %1069 = vst.msk [vmem:[#allocation2] sm:$0xf] %vm1068, %v1021
        %1070 = vst.msk [vmem:[#allocation2 + $0x4] sm:$0xf] %vm1068, %v1023
        %1071 = vst.msk [vmem:[#allocation2 + $0x8] sm:$0xf] %vm1068, %v1025
        %1072 = vst.msk [vmem:[#allocation2 + $0xc] sm:$0xf] %vm1068, %v1027
        %1073 = vst.msk [vmem:[#allocation2 + $0x10] sm:$0xf] %vm1068, %v1029
        %1074 = vst.msk [vmem:[#allocation2 + $0x14] sm:$0xf] %vm1068, %v1031
        %1075 = vst.msk [vmem:[#allocation2 + $0x18] sm:$0xf] %vm1068, %v1033
        %1076 = vst.msk [vmem:[#allocation2 + $0x1c] sm:$0xf] %vm1068, %v1035
        %1077 = vst.msk [vmem:[#allocation2 + $0x20] sm:$0xf] %vm1068, %v1037
        %1078 = vst.msk [vmem:[#allocation2 + $0x24] sm:$0xf] %vm1068, %v1039
        %1079 = vst.msk [vmem:[#allocation2 + $0x28] sm:$0xf] %vm1068, %v1041
        %1080 = vst.msk [vmem:[#allocation2 + $0x2c] sm:$0xf] %vm1068, %v1043
        %1081 = vst.msk [vmem:[#allocation2 + $0x30] sm:$0xf] %vm1068, %v1045
        %1082 = vst.msk [vmem:[#allocation2 + $0x34] sm:$0xf] %vm1068, %v1047
        %1083 = vst.msk [vmem:[#allocation2 + $0x38] sm:$0xf] %vm1068, %v1049
        %1084 = vst.msk [vmem:[#allocation2 + $0x3c] sm:$0xf] %vm1068, %v1051
        %v1093 = vrot.slane %v723, 5
        %v1094 = vrot.slane %v1093, 4
        %v1095 = vrot.slane %v724, 5
        %v1096 = vsel %vm597, %v1094, %v1095
        %v1097 = vrot.slane %v1095, 4
        %v1098 = vrot.slane %v725, 5
        %v1099 = vsel %vm597, %v1097, %v1098
        %v1100 = vrot.slane %v726, 5
        %v1101 = vrot.slane %v1100, 4
        %v1102 = vrot.slane %v727, 5
        %v1103 = vsel %vm597, %v1101, %v1102
        %v1104 = vrot.slane %v1102, 4
        %v1105 = vrot.slane %v728, 5
        %v1106 = vsel %vm597, %v1104, %v1105
        %v1107 = vrot.slane %v729, 5
        %v1108 = vrot.slane %v1107, 4
        %v1109 = vrot.slane %v730, 5
        %v1110 = vsel %vm597, %v1108, %v1109
        %v1111 = vrot.slane %v1109, 4
        %v1112 = vrot.slane %v731, 5
        %v1113 = vsel %vm597, %v1111, %v1112
        %v1114 = vrot.slane %v732, 5
        %v1115 = vrot.slane %v1114, 4
        %v1116 = vrot.slane %v733, 5
        %v1117 = vsel %vm597, %v1115, %v1116
        %v1118 = vrot.slane %v1116, 4
        %v1119 = vrot.slane %v734, 5
        %v1120 = vsel %vm597, %v1118, %v1119
        %v1121 = vrot.slane %v735, 5
        %v1122 = vrot.slane %v1121, 4
        %v1123 = vrot.slane %v736, 5
        %v1124 = vsel %vm597, %v1122, %v1123
        %v1125 = vrot.slane %v1123, 4
        %v1126 = vrot.slane %v737, 5
        %v1127 = vsel %vm597, %v1125, %v1126
        %v1128 = vrot.slane %v738, 5
        %v1129 = vrot.slane %v1128, 4
        %v1130 = vrot.slane %v739, 5
        %v1131 = vsel %vm597, %v1129, %v1130
        %v1132 = vrot.slane %v1130, 4
        %v1133 = vrot.slane %v740, 5
        %v1134 = vsel %vm597, %v1132, %v1133
        %v1135 = vrot.slane %v741, 5
        %v1136 = vrot.slane %v1135, 4
        %v1137 = vrot.slane %v742, 5
        %v1138 = vsel %vm597, %v1136, %v1137
        %v1139 = vrot.slane %v1137, 4
        %v1140 = vrot.slane %v743, 5
        %v1141 = vsel %vm597, %v1139, %v1140
        %v1142 = vrot.slane %v744, 5
        %v1143 = vrot.slane %v1142, 4
        %v1144 = vrot.slane %v745, 5
        %v1145 = vsel %vm597, %v1143, %v1144
        %v1146 = vrot.slane %v1144, 4
        %v1147 = vrot.slane %v746, 5
        %v1148 = vsel %vm597, %v1146, %v1147
        %1149 = vrot.lane.b32.xlu0 %v1096, 20
        %v1150 = vpop.permute.xlu0 %1149
        %1151 = vrot.lane.b32.xlu0 %v1099, 20
        %v1152 = vpop.permute.xlu0 %1151
        %1153 = vrot.lane.b32.xlu0 %v1103, 20
        %v1154 = vpop.permute.xlu0 %1153
        %1155 = vrot.lane.b32.xlu0 %v1106, 20
        %v1156 = vpop.permute.xlu0 %1155
        %1157 = vrot.lane.b32.xlu0 %v1110, 20
        %v1158 = vpop.permute.xlu0 %1157
        %1159 = vrot.lane.b32.xlu0 %v1113, 20
        %v1160 = vpop.permute.xlu0 %1159
        %1161 = vrot.lane.b32.xlu0 %v1117, 20
        %v1162 = vpop.permute.xlu0 %1161
        %1163 = vrot.lane.b32.xlu0 %v1120, 20
        %v1164 = vpop.permute.xlu0 %1163
        %1165 = vrot.lane.b32.xlu0 %v1124, 20
        %v1166 = vpop.permute.xlu0 %1165
        %1167 = vrot.lane.b32.xlu0 %v1127, 20
        %v1168 = vpop.permute.xlu0 %1167
        %1169 = vrot.lane.b32.xlu0 %v1131, 20
        %v1170 = vpop.permute.xlu0 %1169
        %1171 = vrot.lane.b32.xlu0 %v1134, 20
        %v1172 = vpop.permute.xlu0 %1171
        %1173 = vrot.lane.b32.xlu0 %v1138, 20
        %v1174 = vpop.permute.xlu0 %1173
        %1175 = vrot.lane.b32.xlu0 %v1141, 20
        %v1176 = vpop.permute.xlu0 %1175
        %1177 = vrot.lane.b32.xlu0 %v1145, 20
        %v1178 = vpop.permute.xlu0 %1177
        %1179 = vrot.lane.b32.xlu0 %v1148, 20
        %v1180 = vpop.permute.xlu0 %1179
        %vm1197 = vcmask 191648
        %1198 = vst.msk [vmem:[#allocation2] sm:$0xf] %vm1197, %v1150
        %1199 = vst.msk [vmem:[#allocation2 + $0x4] sm:$0xf] %vm1197, %v1152
        %1200 = vst.msk [vmem:[#allocation2 + $0x8] sm:$0xf] %vm1197, %v1154
        %1201 = vst.msk [vmem:[#allocation2 + $0xc] sm:$0xf] %vm1197, %v1156
        %1202 = vst.msk [vmem:[#allocation2 + $0x10] sm:$0xf] %vm1197, %v1158
        %1203 = vst.msk [vmem:[#allocation2 + $0x14] sm:$0xf] %vm1197, %v1160
        %1204 = vst.msk [vmem:[#allocation2 + $0x18] sm:$0xf] %vm1197, %v1162
        %1205 = vst.msk [vmem:[#allocation2 + $0x1c] sm:$0xf] %vm1197, %v1164
        %1206 = vst.msk [vmem:[#allocation2 + $0x20] sm:$0xf] %vm1197, %v1166
        %1207 = vst.msk [vmem:[#allocation2 + $0x24] sm:$0xf] %vm1197, %v1168
        %1208 = vst.msk [vmem:[#allocation2 + $0x28] sm:$0xf] %vm1197, %v1170
        %1209 = vst.msk [vmem:[#allocation2 + $0x2c] sm:$0xf] %vm1197, %v1172
        %1210 = vst.msk [vmem:[#allocation2 + $0x30] sm:$0xf] %vm1197, %v1174
        %1211 = vst.msk [vmem:[#allocation2 + $0x34] sm:$0xf] %vm1197, %v1176
        %1212 = vst.msk [vmem:[#allocation2 + $0x38] sm:$0xf] %vm1197, %v1178
        %1213 = vst.msk [vmem:[#allocation2 + $0x3c] sm:$0xf] %vm1197, %v1180
        %s1214 = sadd.s32 %s266, 2
        %s1215 = smul.u32 %s1214, 3
        %s1216 = smul.addr %s1215, 4
        %s1217 = scalar_lea.vmem %s253, %s1216
        %v1218 = vld [vmem:[%s1217] sm:$0xf]
        %v1219 = vld [vmem:[%s1217 + $0x4] sm:$0xf]
        %v1220 = vld [vmem:[%s1217 + $0x8] sm:$0x1]
        %v1221 = vld [vmem:[%s1217 + $0xc] sm:$0xf]
        %v1222 = vld [vmem:[%s1217 + $0x10] sm:$0xf]
        %v1223 = vld [vmem:[%s1217 + $0x14] sm:$0x1]
        %v1224 = vld [vmem:[%s1217 + $0x18] sm:$0xf]
        %v1225 = vld [vmem:[%s1217 + $0x1c] sm:$0xf]
        %v1226 = vld [vmem:[%s1217 + $0x20] sm:$0x1]
        %v1227 = vld [vmem:[%s1217 + $0x24] sm:$0xf]
        %v1228 = vld [vmem:[%s1217 + $0x28] sm:$0xf]
        %v1229 = vld [vmem:[%s1217 + $0x2c] sm:$0x1]
        %v1230 = vld [vmem:[%s1217 + $0x30] sm:$0xf]
        %v1231 = vld [vmem:[%s1217 + $0x34] sm:$0xf]
        %v1232 = vld [vmem:[%s1217 + $0x38] sm:$0x1]
        %v1233 = vld [vmem:[%s1217 + $0x3c] sm:$0xf]
        %v1234 = vld [vmem:[%s1217 + $0x40] sm:$0xf]
        %v1235 = vld [vmem:[%s1217 + $0x44] sm:$0x1]
        %v1236 = vld [vmem:[%s1217 + $0x48] sm:$0xf]
        %v1237 = vld [vmem:[%s1217 + $0x4c] sm:$0xf]
        %v1238 = vld [vmem:[%s1217 + $0x50] sm:$0x1]
        %v1239 = vld [vmem:[%s1217 + $0x54] sm:$0xf]
        %v1240 = vld [vmem:[%s1217 + $0x58] sm:$0xf]
        %v1241 = vld [vmem:[%s1217 + $0x5c] sm:$0x1]
        %1258 = vrot.lane.b32.xlu0 %v1218, 24
        %v1259 = vpop.permute.xlu0 %1258
        %1260 = vrot.lane.b32.xlu0 %v1219, 24
        %v1261 = vpop.permute.xlu0 %1260
        %1262 = vrot.lane.b32.xlu0 %v1221, 24
        %v1263 = vpop.permute.xlu0 %1262
        %1264 = vrot.lane.b32.xlu0 %v1222, 24
        %v1265 = vpop.permute.xlu0 %1264
        %1266 = vrot.lane.b32.xlu0 %v1224, 24
        %v1267 = vpop.permute.xlu0 %1266
        %1268 = vrot.lane.b32.xlu0 %v1225, 24
        %v1269 = vpop.permute.xlu0 %1268
        %1270 = vrot.lane.b32.xlu0 %v1227, 24
        %v1271 = vpop.permute.xlu0 %1270
        %1272 = vrot.lane.b32.xlu0 %v1228, 24
        %v1273 = vpop.permute.xlu0 %1272
        %1274 = vrot.lane.b32.xlu0 %v1230, 24
        %v1275 = vpop.permute.xlu0 %1274
        %1276 = vrot.lane.b32.xlu0 %v1231, 24
        %v1277 = vpop.permute.xlu0 %1276
        %1278 = vrot.lane.b32.xlu0 %v1233, 24
        %v1279 = vpop.permute.xlu0 %1278
        %1280 = vrot.lane.b32.xlu0 %v1234, 24
        %v1281 = vpop.permute.xlu0 %1280
        %1282 = vrot.lane.b32.xlu0 %v1236, 24
        %v1283 = vpop.permute.xlu0 %1282
        %1284 = vrot.lane.b32.xlu0 %v1237, 24
        %v1285 = vpop.permute.xlu0 %1284
        %1286 = vrot.lane.b32.xlu0 %v1239, 24
        %v1287 = vpop.permute.xlu0 %1286
        %1288 = vrot.lane.b32.xlu0 %v1240, 24
        %v1289 = vpop.permute.xlu0 %1288
        %vm1306 = vcmask 224448
        %1307 = vst.msk [vmem:[#allocation2] sm:$0xf] %vm1306, %v1259
        %1308 = vst.msk [vmem:[#allocation2 + $0x4] sm:$0xf] %vm1306, %v1261
        %1309 = vst.msk [vmem:[#allocation2 + $0x8] sm:$0xf] %vm1306, %v1263
        %1310 = vst.msk [vmem:[#allocation2 + $0xc] sm:$0xf] %vm1306, %v1265
        %1311 = vst.msk [vmem:[#allocation2 + $0x10] sm:$0xf] %vm1306, %v1267
        %1312 = vst.msk [vmem:[#allocation2 + $0x14] sm:$0xf] %vm1306, %v1269
        %1313 = vst.msk [vmem:[#allocation2 + $0x18] sm:$0xf] %vm1306, %v1271
        %1314 = vst.msk [vmem:[#allocation2 + $0x1c] sm:$0xf] %vm1306, %v1273
        %1315 = vst.msk [vmem:[#allocation2 + $0x20] sm:$0xf] %vm1306, %v1275
        %1316 = vst.msk [vmem:[#allocation2 + $0x24] sm:$0xf] %vm1306, %v1277
        %1317 = vst.msk [vmem:[#allocation2 + $0x28] sm:$0xf] %vm1306, %v1279
        %1318 = vst.msk [vmem:[#allocation2 + $0x2c] sm:$0xf] %vm1306, %v1281
        %1319 = vst.msk [vmem:[#allocation2 + $0x30] sm:$0xf] %vm1306, %v1283
        %1320 = vst.msk [vmem:[#allocation2 + $0x34] sm:$0xf] %vm1306, %v1285
        %1321 = vst.msk [vmem:[#allocation2 + $0x38] sm:$0xf] %vm1306, %v1287
        %1322 = vst.msk [vmem:[#allocation2 + $0x3c] sm:$0xf] %vm1306, %v1289
        %v1324 = vshrl.u32 %v1218, 16
        %v1326 = vrot.slane %v1324, 4
        %v1327 = vshll.u32 %v1218, 16
        %v1329 = vrot.slane %v1327, 5
        %v1330 = vor.u32 %v1326, %v1329
        %v1331 = vrot.slane %v1330, 4
        %v1333 = vshll.u32 %v1219, 16
        %v1335 = vrot.slane %v1333, 5
        %v1336 = vsel %vm313, %v1331, %v1335
        %v1337 = vshrl.u32 %v1219, 16
        %v1339 = vrot.slane %v1337, 4
        %v1340 = vor.u32 %v1339, %v1335
        %v1341 = vrot.slane %v1340, 4
        %v1343 = vshll.u32 %v1220, 16
        %v1345 = vrot.slane %v1343, 5
        %v1346 = vsel %vm313, %v1341, %v1345
        %v1348 = vshrl.u32 %v1221, 16
        %v1350 = vrot.slane %v1348, 4
        %v1351 = vshll.u32 %v1221, 16
        %v1353 = vrot.slane %v1351, 5
        %v1354 = vor.u32 %v1350, %v1353
        %v1355 = vrot.slane %v1354, 4
        %v1357 = vshll.u32 %v1222, 16
        %v1359 = vrot.slane %v1357, 5
        %v1360 = vsel %vm313, %v1355, %v1359
        %v1361 = vshrl.u32 %v1222, 16
        %v1363 = vrot.slane %v1361, 4
        %v1364 = vor.u32 %v1363, %v1359
        %v1365 = vrot.slane %v1364, 4
        %v1367 = vshll.u32 %v1223, 16
        %v1369 = vrot.slane %v1367, 5
        %v1370 = vsel %vm313, %v1365, %v1369
        %v1372 = vshrl.u32 %v1224, 16
        %v1374 = vrot.slane %v1372, 4
        %v1375 = vshll.u32 %v1224, 16
        %v1377 = vrot.slane %v1375, 5
        %v1378 = vor.u32 %v1374, %v1377
        %v1379 = vrot.slane %v1378, 4
        %v1381 = vshll.u32 %v1225, 16
        %v1383 = vrot.slane %v1381, 5
        %v1384 = vsel %vm313, %v1379, %v1383
        %v1385 = vshrl.u32 %v1225, 16
        %v1387 = vrot.slane %v1385, 4
        %v1388 = vor.u32 %v1387, %v1383
        %v1389 = vrot.slane %v1388, 4
        %v1391 = vshll.u32 %v1226, 16
        %v1393 = vrot.slane %v1391, 5
        %v1394 = vsel %vm313, %v1389, %v1393
        %v1396 = vshrl.u32 %v1227, 16
        %v1398 = vrot.slane %v1396, 4
        %v1399 = vshll.u32 %v1227, 16
        %v1401 = vrot.slane %v1399, 5
        %v1402 = vor.u32 %v1398, %v1401
        %v1403 = vrot.slane %v1402, 4
        %v1405 = vshll.u32 %v1228, 16
        %v1407 = vrot.slane %v1405, 5
        %v1408 = vsel %vm313, %v1403, %v1407
        %v1409 = vshrl.u32 %v1228, 16
        %v1411 = vrot.slane %v1409, 4
        %v1412 = vor.u32 %v1411, %v1407
        %v1413 = vrot.slane %v1412, 4
        %v1415 = vshll.u32 %v1229, 16
        %v1417 = vrot.slane %v1415, 5
        %v1418 = vsel %vm313, %v1413, %v1417
        %v1420 = vshrl.u32 %v1230, 16
        %v1422 = vrot.slane %v1420, 4
        %v1423 = vshll.u32 %v1230, 16
        %v1425 = vrot.slane %v1423, 5
        %v1426 = vor.u32 %v1422, %v1425
        %v1427 = vrot.slane %v1426, 4
        %v1429 = vshll.u32 %v1231, 16
        %v1431 = vrot.slane %v1429, 5
        %v1432 = vsel %vm313, %v1427, %v1431
        %v1433 = vshrl.u32 %v1231, 16
        %v1435 = vrot.slane %v1433, 4
        %v1436 = vor.u32 %v1435, %v1431
        %v1437 = vrot.slane %v1436, 4
        %v1439 = vshll.u32 %v1232, 16
        %v1441 = vrot.slane %v1439, 5
        %v1442 = vsel %vm313, %v1437, %v1441
        %v1444 = vshrl.u32 %v1233, 16
        %v1446 = vrot.slane %v1444, 4
        %v1447 = vshll.u32 %v1233, 16
        %v1449 = vrot.slane %v1447, 5
        %v1450 = vor.u32 %v1446, %v1449
        %v1451 = vrot.slane %v1450, 4
        %v1453 = vshll.u32 %v1234, 16
        %v1455 = vrot.slane %v1453, 5
        %v1456 = vsel %vm313, %v1451, %v1455
        %v1457 = vshrl.u32 %v1234, 16
        %v1459 = vrot.slane %v1457, 4
        %v1460 = vor.u32 %v1459, %v1455
        %v1461 = vrot.slane %v1460, 4
        %v1463 = vshll.u32 %v1235, 16
        %v1465 = vrot.slane %v1463, 5
        %v1466 = vsel %vm313, %v1461, %v1465
        %v1468 = vshrl.u32 %v1236, 16
        %v1470 = vrot.slane %v1468, 4
        %v1471 = vshll.u32 %v1236, 16
        %v1473 = vrot.slane %v1471, 5
        %v1474 = vor.u32 %v1470, %v1473
        %v1475 = vrot.slane %v1474, 4
        %v1477 = vshll.u32 %v1237, 16
        %v1479 = vrot.slane %v1477, 5
        %v1480 = vsel %vm313, %v1475, %v1479
        %v1481 = vshrl.u32 %v1237, 16
        %v1483 = vrot.slane %v1481, 4
        %v1484 = vor.u32 %v1483, %v1479
        %v1485 = vrot.slane %v1484, 4
        %v1487 = vshll.u32 %v1238, 16
        %v1489 = vrot.slane %v1487, 5
        %v1490 = vsel %vm313, %v1485, %v1489
        %v1492 = vshrl.u32 %v1239, 16
        %v1494 = vrot.slane %v1492, 4
        %v1495 = vshll.u32 %v1239, 16
        %v1497 = vrot.slane %v1495, 5
        %v1498 = vor.u32 %v1494, %v1497
        %v1499 = vrot.slane %v1498, 4
        %v1501 = vshll.u32 %v1240, 16
        %v1503 = vrot.slane %v1501, 5
        %v1504 = vsel %vm313, %v1499, %v1503
        %v1505 = vshrl.u32 %v1240, 16
        %v1507 = vrot.slane %v1505, 4
        %v1508 = vor.u32 %v1507, %v1503
        %v1509 = vrot.slane %v1508, 4
        %v1511 = vshll.u32 %v1241, 16
        %v1513 = vrot.slane %v1511, 5
        %v1514 = vsel %vm313, %v1509, %v1513
        %1515 = vrot.lane.b32.xlu0 %v1336, 28
        %v1516 = vpop.permute.xlu0 %1515
        %1517 = vrot.lane.b32.xlu0 %v1346, 28
        %v1518 = vpop.permute.xlu0 %1517
        %1519 = vrot.lane.b32.xlu0 %v1360, 28
        %v1520 = vpop.permute.xlu0 %1519
        %1521 = vrot.lane.b32.xlu0 %v1370, 28
        %v1522 = vpop.permute.xlu0 %1521
        %1523 = vrot.lane.b32.xlu0 %v1384, 28
        %v1524 = vpop.permute.xlu0 %1523
        %1525 = vrot.lane.b32.xlu0 %v1394, 28
        %v1526 = vpop.permute.xlu0 %1525
        %1527 = vrot.lane.b32.xlu0 %v1408, 28
        %v1528 = vpop.permute.xlu0 %1527
        %1529 = vrot.lane.b32.xlu0 %v1418, 28
        %v1530 = vpop.permute.xlu0 %1529
        %1531 = vrot.lane.b32.xlu0 %v1432, 28
        %v1532 = vpop.permute.xlu0 %1531
        %1533 = vrot.lane.b32.xlu0 %v1442, 28
        %v1534 = vpop.permute.xlu0 %1533
        %1535 = vrot.lane.b32.xlu0 %v1456, 28
        %v1536 = vpop.permute.xlu0 %1535
        %1537 = vrot.lane.b32.xlu0 %v1466, 28
        %v1538 = vpop.permute.xlu0 %1537
        %1539 = vrot.lane.b32.xlu0 %v1480, 28
        %v1540 = vpop.permute.xlu0 %1539
        %1541 = vrot.lane.b32.xlu0 %v1490, 28
        %v1542 = vpop.permute.xlu0 %1541
        %1543 = vrot.lane.b32.xlu0 %v1504, 28
        %v1544 = vpop.permute.xlu0 %1543
        %1545 = vrot.lane.b32.xlu0 %v1514, 28
        %v1546 = vpop.permute.xlu0 %1545
        %vm1563 = vcmask 257248
        %1564 = vst.msk [vmem:[#allocation2] sm:$0xf] %vm1563, %v1516
        %1565 = vst.msk [vmem:[#allocation2 + $0x4] sm:$0xf] %vm1563, %v1518
        %1566 = vst.msk [vmem:[#allocation2 + $0x8] sm:$0xf] %vm1563, %v1520
        %1567 = vst.msk [vmem:[#allocation2 + $0xc] sm:$0xf] %vm1563, %v1522
        %1568 = vst.msk [vmem:[#allocation2 + $0x10] sm:$0xf] %vm1563, %v1524
        %1569 = vst.msk [vmem:[#allocation2 + $0x14] sm:$0xf] %vm1563, %v1526
        %1570 = vst.msk [vmem:[#allocation2 + $0x18] sm:$0xf] %vm1563, %v1528
        %1571 = vst.msk [vmem:[#allocation2 + $0x1c] sm:$0xf] %vm1563, %v1530
        %1572 = vst.msk [vmem:[#allocation2 + $0x20] sm:$0xf] %vm1563, %v1532
        %1573 = vst.msk [vmem:[#allocation2 + $0x24] sm:$0xf] %vm1563, %v1534
        %1574 = vst.msk [vmem:[#allocation2 + $0x28] sm:$0xf] %vm1563, %v1536
        %1575 = vst.msk [vmem:[#allocation2 + $0x2c] sm:$0xf] %vm1563, %v1538
        %1576 = vst.msk [vmem:[#allocation2 + $0x30] sm:$0xf] %vm1563, %v1540
        %1577 = vst.msk [vmem:[#allocation2 + $0x34] sm:$0xf] %vm1563, %v1542
        %1578 = vst.msk [vmem:[#allocation2 + $0x38] sm:$0xf] %vm1563, %v1544
        %1579 = vst.msk [vmem:[#allocation2 + $0x3c] sm:$0xf] %vm1563, %v1546
        %v1588 = vrot.slane %v1218, 5
        %v1589 = vrot.slane %v1588, 4
        %v1590 = vrot.slane %v1219, 5
        %v1591 = vsel %vm597, %v1589, %v1590
        %v1592 = vrot.slane %v1590, 4
        %v1593 = vrot.slane %v1220, 5
        %v1594 = vsel %vm597, %v1592, %v1593
        %v1595 = vrot.slane %v1221, 5
        %v1596 = vrot.slane %v1595, 4
        %v1597 = vrot.slane %v1222, 5
        %v1598 = vsel %vm597, %v1596, %v1597
        %v1599 = vrot.slane %v1597, 4
        %v1600 = vrot.slane %v1223, 5
        %v1601 = vsel %vm597, %v1599, %v1600
        %v1602 = vrot.slane %v1224, 5
        %v1603 = vrot.slane %v1602, 4
        %v1604 = vrot.slane %v1225, 5
        %v1605 = vsel %vm597, %v1603, %v1604
        %v1606 = vrot.slane %v1604, 4
        %v1607 = vrot.slane %v1226, 5
        %v1608 = vsel %vm597, %v1606, %v1607
        %v1609 = vrot.slane %v1227, 5
        %v1610 = vrot.slane %v1609, 4
        %v1611 = vrot.slane %v1228, 5
        %v1612 = vsel %vm597, %v1610, %v1611
        %v1613 = vrot.slane %v1611, 4
        %v1614 = vrot.slane %v1229, 5
        %v1615 = vsel %vm597, %v1613, %v1614
        %v1616 = vrot.slane %v1230, 5
        %v1617 = vrot.slane %v1616, 4
        %v1618 = vrot.slane %v1231, 5
        %v1619 = vsel %vm597, %v1617, %v1618
        %v1620 = vrot.slane %v1618, 4
        %v1621 = vrot.slane %v1232, 5
        %v1622 = vsel %vm597, %v1620, %v1621
        %v1623 = vrot.slane %v1233, 5
        %v1624 = vrot.slane %v1623, 4
        %v1625 = vrot.slane %v1234, 5
        %v1626 = vsel %vm597, %v1624, %v1625
        %v1627 = vrot.slane %v1625, 4
        %v1628 = vrot.slane %v1235, 5
        %v1629 = vsel %vm597, %v1627, %v1628
        %v1630 = vrot.slane %v1236, 5
        %v1631 = vrot.slane %v1630, 4
        %v1632 = vrot.slane %v1237, 5
        %v1633 = vsel %vm597, %v1631, %v1632
        %v1634 = vrot.slane %v1632, 4
        %v1635 = vrot.slane %v1238, 5
        %v1636 = vsel %vm597, %v1634, %v1635
        %v1637 = vrot.slane %v1239, 5
        %v1638 = vrot.slane %v1637, 4
        %v1639 = vrot.slane %v1240, 5
        %v1640 = vsel %vm597, %v1638, %v1639
        %v1641 = vrot.slane %v1639, 4
        %v1642 = vrot.slane %v1241, 5
        %v1643 = vsel %vm597, %v1641, %v1642
        %1644 = vrot.lane.b32.xlu0 %v1591, 32
        %v1645 = vpop.permute.xlu0 %1644
        %1646 = vrot.lane.b32.xlu0 %v1594, 32
        %v1647 = vpop.permute.xlu0 %1646
        %1648 = vrot.lane.b32.xlu0 %v1598, 32
        %v1649 = vpop.permute.xlu0 %1648
        %1650 = vrot.lane.b32.xlu0 %v1601, 32
        %v1651 = vpop.permute.xlu0 %1650
        %1652 = vrot.lane.b32.xlu0 %v1605, 32
        %v1653 = vpop.permute.xlu0 %1652
        %1654 = vrot.lane.b32.xlu0 %v1608, 32
        %v1655 = vpop.permute.xlu0 %1654
        %1656 = vrot.lane.b32.xlu0 %v1612, 32
        %v1657 = vpop.permute.xlu0 %1656
        %1658 = vrot.lane.b32.xlu0 %v1615, 32
        %v1659 = vpop.permute.xlu0 %1658
        %1660 = vrot.lane.b32.xlu0 %v1619, 32
        %v1661 = vpop.permute.xlu0 %1660
        %1662 = vrot.lane.b32.xlu0 %v1622, 32
        %v1663 = vpop.permute.xlu0 %1662
        %1664 = vrot.lane.b32.xlu0 %v1626, 32
        %v1665 = vpop.permute.xlu0 %1664
        %1666 = vrot.lane.b32.xlu0 %v1629, 32
        %v1667 = vpop.permute.xlu0 %1666
        %1668 = vrot.lane.b32.xlu0 %v1633, 32
        %v1669 = vpop.permute.xlu0 %1668
        %1670 = vrot.lane.b32.xlu0 %v1636, 32
        %v1671 = vpop.permute.xlu0 %1670
        %1672 = vrot.lane.b32.xlu0 %v1640, 32
        %v1673 = vpop.permute.xlu0 %1672
        %1674 = vrot.lane.b32.xlu0 %v1643, 32
        %v1675 = vpop.permute.xlu0 %1674
        %vm1692 = vcmask 290048
        %1693 = vst.msk [vmem:[#allocation2] sm:$0xf] %vm1692, %v1645
        %1694 = vst.msk [vmem:[#allocation2 + $0x4] sm:$0xf] %vm1692, %v1647
        %1695 = vst.msk [vmem:[#allocation2 + $0x8] sm:$0xf] %vm1692, %v1649
        %1696 = vst.msk [vmem:[#allocation2 + $0xc] sm:$0xf] %vm1692, %v1651
        %1697 = vst.msk [vmem:[#allocation2 + $0x10] sm:$0xf] %vm1692, %v1653
        %1698 = vst.msk [vmem:[#allocation2 + $0x14] sm:$0xf] %vm1692, %v1655
        %1699 = vst.msk [vmem:[#allocation2 + $0x18] sm:$0xf] %vm1692, %v1657
        %1700 = vst.msk [vmem:[#allocation2 + $0x1c] sm:$0xf] %vm1692, %v1659
        %1701 = vst.msk [vmem:[#allocation2 + $0x20] sm:$0xf] %vm1692, %v1661
        %1702 = vst.msk [vmem:[#allocation2 + $0x24] sm:$0xf] %vm1692, %v1663
        %1703 = vst.msk [vmem:[#allocation2 + $0x28] sm:$0xf] %vm1692, %v1665
        %1704 = vst.msk [vmem:[#allocation2 + $0x2c] sm:$0xf] %vm1692, %v1667
        %1705 = vst.msk [vmem:[#allocation2 + $0x30] sm:$0xf] %vm1692, %v1669
        %1706 = vst.msk [vmem:[#allocation2 + $0x34] sm:$0xf] %vm1692, %v1671
        %1707 = vst.msk [vmem:[#allocation2 + $0x38] sm:$0xf] %vm1692, %v1673
        %1708 = vst.msk [vmem:[#allocation2 + $0x3c] sm:$0xf] %vm1692, %v1675
        %v1709 = vld [vmem:[#allocation2] sm:$0xf]
        %v1710 = vld [vmem:[#allocation2 + $0x4] sm:$0xf]
        %v1711 = vld [vmem:[#allocation2 + $0x8] sm:$0xf]
        %v1712 = vld [vmem:[#allocation2 + $0xc] sm:$0xf]
        %v1713 = vld [vmem:[#allocation2 + $0x10] sm:$0xf]
        %v1714 = vld [vmem:[#allocation2 + $0x14] sm:$0xf]
        %v1715 = vld [vmem:[#allocation2 + $0x18] sm:$0xf]
        %v1716 = vld [vmem:[#allocation2 + $0x1c] sm:$0xf]
        %v1717 = vld [vmem:[#allocation2 + $0x20] sm:$0xf]
        %v1718 = vld [vmem:[#allocation2 + $0x24] sm:$0xf]
        %v1719 = vld [vmem:[#allocation2 + $0x28] sm:$0xf]
        %v1720 = vld [vmem:[#allocation2 + $0x2c] sm:$0xf]
        %v1721 = vld [vmem:[#allocation2 + $0x30] sm:$0xf]
        %v1722 = vld [vmem:[#allocation2 + $0x34] sm:$0xf]
        %v1723 = vld [vmem:[#allocation2 + $0x38] sm:$0xf]
        %v1724 = vld [vmem:[#allocation2 + $0x3c] sm:$0xf]
        %v1725 = vld [vmem:[%s257] sm:$0xf]
        %v1726 = vld [vmem:[%s257 + $0x4] sm:$0xf]
        %v1727 = vld [vmem:[%s257 + $0x8] sm:$0xf]
        %v1728 = vld [vmem:[%s257 + $0xc] sm:$0xf]
        %v1729 = vld [vmem:[%s257 + $0x10] sm:$0x3]
        %v1746 = vunpack.c.l.b16 %v1709
        %v1747 = vunpack.c.l.b16 %v1710
        %v1748 = vunpack.c.l.b16 %v1711
        %v1749 = vunpack.c.l.b16 %v1712
        %v1750 = vunpack.c.l.b16 %v1713
        %v1751 = vunpack.c.l.b16 %v1714
        %v1752 = vunpack.c.l.b16 %v1715
        %v1753 = vunpack.c.l.b16 %v1716
        %v1754 = vunpack.c.l.b16 %v1717
        %v1755 = vunpack.c.l.b16 %v1718
        %v1756 = vunpack.c.l.b16 %v1719
        %v1757 = vunpack.c.l.b16 %v1720
        %v1758 = vunpack.c.l.b16 %v1721
        %v1759 = vunpack.c.l.b16 %v1722
        %v1760 = vunpack.c.l.b16 %v1723
        %v1761 = vunpack.c.l.b16 %v1724
        %v1762 = vpack.c.b16 %v1747, %v1746
        %v1763 = vpack.c.b16 %v1749, %v1748
        %v1764 = vpack.c.b16 %v1751, %v1750
        %v1765 = vpack.c.b16 %v1753, %v1752
        %v1766 = vpack.c.b16 %v1755, %v1754
        %v1767 = vpack.c.b16 %v1757, %v1756
        %v1768 = vpack.c.b16 %v1759, %v1758
        %v1769 = vpack.c.b16 %v1761, %v1760
        %v1775 = vunpack.c.l.b16 %v1725
        %v1776 = vunpack.c.l.b16 %v1726
        %v1777 = vunpack.c.l.b16 %v1727
        %v1778 = vunpack.c.l.b16 %v1728
        %v1779 = vunpack.c.l.b16 %v1729
        %v1780 = vpack.c.b16 %v1776, %v1775
        %v1781 = vpack.c.b16 %v1778, %v1777
        %v1782 = vpack.c.b16 %v1779, %v1779
        %vm1785 = vcmask 293888
        %v1787 = vsel %vm1785, %v1762, 0
        %v1790 = vsel %vm1785, %v1763, 0
        %v1793 = vsel %vm1785, %v1764, 0
        %v1796 = vsel %vm1785, %v1765, 0
        %v1799 = vsel %vm1785, %v1766, 0
        %v1802 = vsel %vm1785, %v1767, 0
        %v1805 = vsel %vm1785, %v1768, 0
        %v1808 = vsel %vm1785, %v1769, 0
        %vm1810 = vcmask 1041408
        %v1812 = vsel %vm1810, %v1782, 0
        %1814 = vmatpush.bf16.msra.mxu0 0
        %1815 = vmatpush.bf16.msra.mxu0 0
        %1816 = vmatpush.bf16.msra.mxu0 0
        %1817 = vmatpush.bf16.msra.mxu0 0
        %1818 = vmatpush.bf16.msra.mxu0 0
        %1819 = vmatpush.bf16.msra.mxu0 %v1812
        %1820 = vmatpush.bf16.msra.mxu0 %v1781
        %1821 = vmatpush.bf16.msra.mxu0 %v1780
        %1822 = vmatmul.bf16.gmra.mxu0 %v1787
        %v1823 = vpop.f32.mrf.mxu0
        %v1824 = vadd.f32 0.0, %v1823
        %v1825 = vpop.f32.mrf.mxu0
        %v1826 = vadd.f32 0.0, %v1825
        %1827 = vmatmul.bf16.gmra.mxu0 %v1790
        %v1828 = vpop.f32.mrf.mxu0
        %v1829 = vadd.f32 0.0, %v1828
        %v1830 = vpop.f32.mrf.mxu0
        %v1831 = vadd.f32 0.0, %v1830
        %1832 = vmatmul.bf16.gmra.mxu0 %v1793
        %v1833 = vpop.f32.mrf.mxu0
        %v1834 = vadd.f32 0.0, %v1833
        %v1835 = vpop.f32.mrf.mxu0
        %v1836 = vadd.f32 0.0, %v1835
        %1837 = vmatmul.bf16.gmra.mxu0 %v1796
        %v1838 = vpop.f32.mrf.mxu0
        %v1839 = vadd.f32 0.0, %v1838
        %v1840 = vpop.f32.mrf.mxu0
        %v1841 = vadd.f32 0.0, %v1840
        %1842 = vmatmul.bf16.gmra.mxu0 %v1799
        %v1843 = vpop.f32.mrf.mxu0
        %v1844 = vadd.f32 0.0, %v1843
        %v1845 = vpop.f32.mrf.mxu0
        %v1846 = vadd.f32 0.0, %v1845
        %1847 = vmatmul.bf16.gmra.mxu0 %v1802
        %v1848 = vpop.f32.mrf.mxu0
        %v1849 = vadd.f32 0.0, %v1848
        %v1850 = vpop.f32.mrf.mxu0
        %v1851 = vadd.f32 0.0, %v1850
        %1852 = vmatmul.bf16.gmra.mxu0 %v1805
        %v1853 = vpop.f32.mrf.mxu0
        %v1854 = vadd.f32 0.0, %v1853
        %v1855 = vpop.f32.mrf.mxu0
        %v1856 = vadd.f32 0.0, %v1855
        %1857 = vmatmul.bf16.gmra.mxu0 %v1808
        %v1858 = vpop.f32.mrf.mxu0
        %v1859 = vadd.f32 0.0, %v1858
        %v1860 = vpop.f32.mrf.mxu0
        %v1861 = vadd.f32 0.0, %v1860
        %1862 = vdwg.mxu0
        %v1863 = vld [vmem:[%s260] sm:$0x1]
        %v1865 = vperm.slane %v1863, 0
        %v1867 = vmul.f32 %v1824, %v1865
        %v1868 = vmul.f32 %v1826, %v1865
        %v1869 = vmul.f32 %v1829, %v1865
        %v1870 = vmul.f32 %v1831, %v1865
        %v1871 = vmul.f32 %v1834, %v1865
        %v1872 = vmul.f32 %v1836, %v1865
        %v1873 = vmul.f32 %v1839, %v1865
        %v1874 = vmul.f32 %v1841, %v1865
        %v1875 = vmul.f32 %v1844, %v1865
        %v1876 = vmul.f32 %v1846, %v1865
        %v1877 = vmul.f32 %v1849, %v1865
        %v1878 = vmul.f32 %v1851, %v1865
        %v1879 = vmul.f32 %v1854, %v1865
        %v1880 = vmul.f32 %v1856, %v1865
        %v1881 = vmul.f32 %v1859, %v1865
        %v1882 = vmul.f32 %v1861, %v1865
        %v1883 = vld [vmem:[%s263] sm:$0x1]
        %v1885 = vperm.slane %v1883, 0
        %v1887 = vadd.f32 %v1867, %v1885
        %v1888 = vadd.f32 %v1868, %v1885
        %v1889 = vadd.f32 %v1869, %v1885
        %v1890 = vadd.f32 %v1870, %v1885
        %v1891 = vadd.f32 %v1871, %v1885
        %v1892 = vadd.f32 %v1872, %v1885
        %v1893 = vadd.f32 %v1873, %v1885
        %v1894 = vadd.f32 %v1874, %v1885
        %v1895 = vadd.f32 %v1875, %v1885
        %v1896 = vadd.f32 %v1876, %v1885
        %v1897 = vadd.f32 %v1877, %v1885
        %v1898 = vadd.f32 %v1878, %v1885
        %v1899 = vadd.f32 %v1879, %v1885
        %v1900 = vadd.f32 %v1880, %v1885
        %v1901 = vadd.f32 %v1881, %v1885
        %v1902 = vadd.f32 %v1882, %v1885
        %vm1903 = vcmp.gt.f32.partialorder %v1887, 0.0
        %vm1904 = vcmp.gt.f32.partialorder %v1888, 0.0
        %vm1905 = vcmp.gt.f32.partialorder %v1889, 0.0
        %vm1906 = vcmp.gt.f32.partialorder %v1890, 0.0
        %vm1907 = vcmp.gt.f32.partialorder %v1891, 0.0
        %vm1908 = vcmp.gt.f32.partialorder %v1892, 0.0
        %vm1909 = vcmp.gt.f32.partialorder %v1893, 0.0
        %vm1910 = vcmp.gt.f32.partialorder %v1894, 0.0
        %vm1911 = vcmp.gt.f32.partialorder %v1895, 0.0
        %vm1912 = vcmp.gt.f32.partialorder %v1896, 0.0
        %vm1913 = vcmp.gt.f32.partialorder %v1897, 0.0
        %vm1914 = vcmp.gt.f32.partialorder %v1898, 0.0
        %vm1915 = vcmp.gt.f32.partialorder %v1899, 0.0
        %vm1916 = vcmp.gt.f32.partialorder %v1900, 0.0
        %vm1917 = vcmp.gt.f32.partialorder %v1901, 0.0
        %vm1918 = vcmp.gt.f32.partialorder %v1902, 0.0
        %v1919 = vmul.f32 %v1887, 0.1
        %v1920 = vmul.f32 %v1888, 0.1
        %v1921 = vmul.f32 %v1889, 0.1
        %v1922 = vmul.f32 %v1890, 0.1
        %v1923 = vmul.f32 %v1891, 0.1
        %v1924 = vmul.f32 %v1892, 0.1
        %v1925 = vmul.f32 %v1893, 0.1
        %v1926 = vmul.f32 %v1894, 0.1
        %v1927 = vmul.f32 %v1895, 0.1
        %v1928 = vmul.f32 %v1896, 0.1
        %v1929 = vmul.f32 %v1897, 0.1
        %v1930 = vmul.f32 %v1898, 0.1
        %v1931 = vmul.f32 %v1899, 0.1
        %v1932 = vmul.f32 %v1900, 0.1
        %v1933 = vmul.f32 %v1901, 0.1
        %v1934 = vmul.f32 %v1902, 0.1
        %v1935 = vsel %vm1903, %v1887, %v1919
        %v1936 = vsel %vm1904, %v1888, %v1920
        %v1937 = vsel %vm1905, %v1889, %v1921
        %v1938 = vsel %vm1906, %v1890, %v1922
        %v1939 = vsel %vm1907, %v1891, %v1923
        %v1940 = vsel %vm1908, %v1892, %v1924
        %v1941 = vsel %vm1909, %v1893, %v1925
        %v1942 = vsel %vm1910, %v1894, %v1926
        %v1943 = vsel %vm1911, %v1895, %v1927
        %v1944 = vsel %vm1912, %v1896, %v1928
        %v1945 = vsel %vm1913, %v1897, %v1929
        %v1946 = vsel %vm1914, %v1898, %v1930
        %v1947 = vsel %vm1915, %v1899, %v1931
        %v1948 = vsel %vm1916, %v1900, %v1932
        %v1949 = vsel %vm1917, %v1901, %v1933
        %v1950 = vsel %vm1918, %v1902, %v1934
        %1951 = vst [vmem:[%s248] sm:$0xff] %v1935
        %1952 = vst [vmem:[%s248 + $0x8] sm:$0xff] %v1936
        %1953 = vst [vmem:[%s248 + $0x10] sm:$0xff] %v1937
        %1954 = vst [vmem:[%s248 + $0x18] sm:$0xff] %v1938
        %1955 = vst [vmem:[%s248 + $0x20] sm:$0xff] %v1939
        %1956 = vst [vmem:[%s248 + $0x28] sm:$0xff] %v1940
        %1957 = vst [vmem:[%s248 + $0x30] sm:$0xff] %v1941
        %1958 = vst [vmem:[%s248 + $0x38] sm:$0xff] %v1942
        %1959 = vst [vmem:[%s248 + $0x40] sm:$0xff] %v1943
        %1960 = vst [vmem:[%s248 + $0x48] sm:$0xff] %v1944
        %1961 = vst [vmem:[%s248 + $0x50] sm:$0xff] %v1945
        %1962 = vst [vmem:[%s248 + $0x58] sm:$0xff] %v1946
        %1963 = vst [vmem:[%s248 + $0x60] sm:$0xff] %v1947
        %1964 = vst [vmem:[%s248 + $0x68] sm:$0xff] %v1948
        %1965 = vst [vmem:[%s248 + $0x70] sm:$0xff] %v1949
        %1966 = vst [vmem:[%s248 + $0x78] sm:$0xff] %v1950
        %s1967 = sand.u32 %s153, 1
        %s1968 = scalar_lea.sflag [#allocation4], %s1967
        %s1969 = sand.u32 %s153, 1
        %s1970 = smul.addr %s1969, 128
        %s1971 = scalar_lea.vmem [#allocation3], %s1970
        // Predicated region
        $region37: #{tpu_custom_call.1} parent=35 // pred_check
          %p1972 = pneg %p163
        $region38: #{tpu_custom_call.1} parent=35 // pred_check_branch
          %1974 = sbr.rel (%p1972) target = $region40
        $region39: #{tpu_custom_call.1} parent=35 // pred_region
          %s1975 = smul.u32 16, %s24
          %1977 = vsyncadd %s1968, 0
          %s1978 = sadd.s32 %s25, %s1975
          %s1979 = smul.addr %s23, 32
          %s1980 = sadd.s32 %s1978, %s1979
          %s1981 = smul.addr %s1980, 8
          %s1982 = scalar_lea.hbm %s4, %s1981
          %s1983 = sshll.u32 %s1971, 4
          %s1984 = int_to_ptr.vmem [resolvable:$true] %s1983
          %s1985 = sshll.u32 %s1982, 4
          %s1986 = int_to_ptr.hbm [resolvable:$true] %s1985
          %1991 = dma.vmem_to_hbm [thread:$0]  %s1984, 2048, %s1986, %s1968, 128, 128, 8
        $region40: #{tpu_custom_call.1} parent=35 // pred_fallthru
          _
      $region36: #{tpu_custom_call.1} parent=5 // pred_fallthru
        _
      %p1992 = scmp.le.s32.totalorder 2, %s13
      // Predicated region
      $region41: #{tpu_custom_call.1} parent=5 // pred_check
        %p1993 = pneg %p1992
      $region42: #{tpu_custom_call.1} parent=5 // pred_check_branch
        %1995 = sbr.rel (%p1993) target = $region44
      $region43: #{tpu_custom_call.1} parent=5 // pred_region
        %s1996 = ssub.s32 %s13, 2
        // Predicated region
        $region45: #{tpu_custom_call.1} parent=43 // pred_check
          %p1997 = pneg %p169
        $region46: #{tpu_custom_call.1} parent=43 // pred_check_branch
          %1999 = sbr.rel (%p1997) target = $region48
        $region47: #{tpu_custom_call.1} parent=43 // pred_region
          %s2000 = sand.u32 %s154, 1
          %s2001 = scalar_lea.sflag [#allocation4], %s2000
          %s2002 = sand.u32 %s154, 1
          %s2003 = smul.addr %s2002, 128
          %s2004 = scalar_lea.vmem [#allocation3], %s2003
          %2006 = dma.done %s2001, 2048
        $region48: #{tpu_custom_call.1} parent=43 // pred_fallthru
          _
      $region44: #{tpu_custom_call.1} parent=5 // pred_fallthru
        _
    $region6: #{tpu_custom_call.1} parent=1 // loop_footer
      %s17 = sadd.s32 1, %s13
    $region7: #{tpu_custom_call.1} parent=1 // loop_footer_branch
      %12 = sbr.rel target = $region3
    $region8: #{tpu_custom_call.1} parent=1 // loop_exit
      _
    %2007 = vsyncpa [#allocation4], 1
    %s2008 = scalar_lea.sflag [#allocation4], 1
    %2009 = vsyncpa %s2008, 1

</llo_original>
